<compile_context>
chip_gen: v6e
topology: v6e:2x2x1
jax: 0.10.0
libtpu: 0.0.40
codegen_flags: <defaults>
</compile_context>

<pallas_src>
import functools

import jax
import jax.numpy as jnp
from jax.experimental import pallas as pl
from jax.experimental.pallas import tpu as pltpu


def _predictor_kernel(tok_ref, table_ref, w_ref, b_ref, out_ref):
    """One batch-block per grid step.

    tok_ref   : (M, K)     int32   token im2col windows, M = batch_block * Tout_pad
    table_ref : (V, E)     bf16    embedding table (resident, constant index map)
    w_ref     : (K*E, D)   bf16    fused conv+linear weight
    b_ref     : (1, D)     f32     output linear bias
    out_ref   : (M, D)     f32
    """
    M, K = tok_ref.shape
    V, E = table_ref.shape

    toks = tok_ref[...]                                            # (M, K) int32
    table = table_ref[...]                                         # (V, E) bf16
    iota_v = jax.lax.broadcasted_iota(jnp.int32, (M, V), 1)

    # One-hot embedding gather on the MXU for each of the K conv taps, then build
    # the im2col LHS (M, K*E) by lane-concatenation (E is a multiple of 128).
    cols = []
    for k in range(K):                                             # K is small & static
        onehot_k = (iota_v == toks[:, k:k + 1]).astype(jnp.bfloat16)   # (M, V)
        emb_k = jnp.dot(onehot_k, table,
                        preferred_element_type=jnp.float32)            # (M, E) f32
        cols.append(emb_k.astype(jnp.bfloat16))
    lhs = jnp.concatenate(cols, axis=-1)                           # (M, K*E) bf16

    # Depthwise conv + output linear folded into a single deep MXU matmul.
    out_ref[...] = (
        jnp.dot(lhs, w_ref[...], preferred_element_type=jnp.float32)
        + b_ref[...]
    )


def predictor_forward_pallas(ctxed, emb_table, conv_w, lin_w, lin_b,
                             context_size, *, batch_block=8):
    """ctxed: (B, T) int32 context-extended tokens -> (B, T - K + 1, D) f32."""
    B, T = ctxed.shape
    K = context_size
    V, E = emb_table.shape
    D = lin_w.shape[1]
    Tout = T - K + 1

    # Alignment padding: time -> multiple of 8 sublanes, batch -> multiple of block.
    Tout_pad = ((Tout + 7) // 8) * 8
    B_pad = ((B + batch_block - 1) // batch_block) * batch_block
    T_pad = Tout_pad + K - 1
    ctxed_p = jnp.pad(ctxed.astype(jnp.int32),
                      ((0, B_pad - B), (0, T_pad - T)))            # pad value 0 = blank

    # Token-level im2col (tiny int32 data): tok_win[b, t, k] = ctxed_p[b, t + k].
    tok_win = jnp.stack([ctxed_p[:, k:k + Tout_pad] for k in range(K)], axis=-1)
    tok_win = tok_win.reshape(B_pad * Tout_pad, K)

    # Fold the depthwise conv into the output linear: W'[(k,e), d] = conv_w[k,e]*lin_w[e,d].
    fused_w = (conv_w[:, :, None] * lin_w[None, :, :]).reshape(K * E, D)
    fused_w = fused_w.astype(jnp.bfloat16)
    table_bf16 = emb_table.astype(jnp.bfloat16)
    bias = lin_b.reshape(1, D).astype(jnp.float32)

    Mb = batch_block * Tout_pad            # MXU LHS rows per grid step (>= 128)
    M_total = B_pad * Tout_pad
    grid = (B_pad // batch_block,)

    cost = pl.CostEstimate(
        flops=2 * M_total * (K * V * E + K * E * D),
        transcendentals=0,
        bytes_accessed=(tok_win.size * 4 + table_bf16.size * 2
                        + fused_w.size * 2 + bias.size * 4 + M_total * D * 4),
    )

    out = pl.pallas_call(
        _predictor_kernel,
        out_shape=jax.ShapeDtypeStruct((M_total, D), jnp.float32),
        grid_spec=pltpu.PrefetchScalarGridSpec(
            num_scalar_prefetch=0,
            grid=grid,
            in_specs=[
                pl.BlockSpec((Mb, K), lambda b: (b, 0)),
                pl.BlockSpec((V, E), lambda b: (0, 0)),
                pl.BlockSpec((K * E, D), lambda b: (0, 0)),
                pl.BlockSpec((1, D), lambda b: (0, 0)),
            ],
            out_specs=pl.BlockSpec((Mb, D), lambda b: (b, 0)),
        ),
        compiler_params=pltpu.CompilerParams(
            dimension_semantics=("parallel",),
            vmem_limit_bytes=32 * 1024 * 1024,   # safe on v5e scoped / v7x physical
        ),
        cost_estimate=cost,
    )(tok_win, table_bf16, fused_w, bias)

    return out.reshape(B_pad, Tout_pad, D)[:B, :Tout, :]


def stateless_predictor_forward(tokens, lengths, state, params, *,
                                context_size, blank_token):
    """Mirrors StatelessPredictor.forward.

    tokens : (B, U) int32
    lengths: (B,)   int32
    state  : (1, context_size - 1) int32
    returns: (output (B, U+1, D) f32, lengths, out_state (B, context_size) i32)
    """
    B, _ = tokens.shape

    state_b = jnp.broadcast_to(state, (B, state.shape[1])).astype(jnp.int32)
    padded = jnp.pad(tokens.astype(jnp.int32), ((0, 0), (1, 0)),
                     constant_values=blank_token)                   # _left_padding
    ctxed = jnp.concatenate([state_b, padded], axis=1)              # (B, T)
    cache_pos = ctxed.shape[1] - context_size
    out_state = ctxed[:, cache_pos:]                                # (B, K)

    output = predictor_forward_pallas(
        ctxed, params["embedding"], params["conv_w"], params["lin_w"],
        params["lin_b"], context_size)

    return output, lengths, out_state


def init_params(key, num_symbols, embedding_dim, output_dim, context_size):
    k_emb, k_conv, k_lw, k_lb = jax.random.split(key, 4)
    embedding = jax.random.normal(k_emb, (num_symbols, embedding_dim),
                                  dtype=jnp.float32)
    # PyTorch depthwise Conv1d weight is (E, 1, K); stored transposed as (K, E).
    conv_w = jax.random.normal(k_conv, (context_size, embedding_dim),
                               dtype=jnp.float32) * 0.1
    # PyTorch Linear weight is (D, E); stored transposed as (E, D).
    lin_w = jax.random.normal(k_lw, (embedding_dim, output_dim),
                              dtype=jnp.float32) * 0.05
    lin_b = jax.random.normal(k_lb, (1, output_dim), dtype=jnp.float32) * 0.01
    return {"embedding": embedding, "conv_w": conv_w,
            "lin_w": lin_w, "lin_b": lin_b}


def reference_forward(tokens, lengths, state, params, *, context_size,
                      blank_token):
    """Pure-JAX f32 reference for correctness checking."""
    B, _ = tokens.shape
    state_b = jnp.broadcast_to(state, (B, state.shape[1])).astype(jnp.int32)
    padded = jnp.pad(tokens.astype(jnp.int32), ((0, 0), (1, 0)),
                     constant_values=blank_token)
    ctxed = jnp.concatenate([state_b, padded], axis=1)
    out_state = ctxed[:, ctxed.shape[1] - context_size:]
    embs = params["embedding"][ctxed]                               # (B, T, E)
    K = context_size
    Tout = embs.shape[1] - K + 1
    y = jnp.zeros((B, Tout, embs.shape[2]), jnp.float32)
    for k in range(K):
        y = y + embs[:, k:k + Tout, :] * params["conv_w"][k][None, None, :]
    out = jnp.einsum("bte,ed->btd", y, params["lin_w"]) + params["lin_b"].reshape(-1)
    return out, lengths, out_state


if __name__ == "__main__":
    # Small shapes consistent with the module (num_symbols/context match defaults).
    NUM_SYMBOLS = 128
    EMB_DIM = 128
    OUT_DIM = 256
    CONTEXT = 5
    B, U = 2, 8
    BLANK = 0

    key = jax.random.PRNGKey(0)
    k_params, k_tok = jax.random.split(key, 2)

    params = init_params(k_params, NUM_SYMBOLS, EMB_DIM, OUT_DIM, CONTEXT)

    tokens = jax.random.randint(k_tok, (B, U), 1, NUM_SYMBOLS, dtype=jnp.int32)
    lengths = jnp.full((B,), U, dtype=jnp.int32)
    state = jnp.zeros((1, CONTEXT - 1), dtype=jnp.int32)   # init_state(1)

    fwd = functools.partial(stateless_predictor_forward,
                            context_size=CONTEXT, blank_token=BLANK)
    out, out_lengths, out_state = fwd(tokens, lengths, state, params)
    jax.block_until_ready(out)
    jax.block_until_ready(out_state)

    # Correctness vs pure-JAX f32 reference (kernel uses bf16 MXU operands with
    # f32 accumulation, hence the relaxed tolerance).
    ref_out, ref_len, ref_state = reference_forward(
        tokens, lengths, state, params, context_size=CONTEXT, blank_token=BLANK)
    assert out.shape == (B, U + 1, OUT_DIM)
    assert out_state.shape == (B, CONTEXT)
    assert jnp.allclose(out, ref_out, atol=2e-2, rtol=2e-2)
    assert jnp.array_equal(out_state, ref_state)
    assert jnp.array_equal(out_lengths, ref_len)

    print("KERNEL_OK")
</pallas_src>

<mosaic_0001>
module attributes {stable_mosaic.version = 11 : i64} {
  func.func @_predictor_kernel(%arg0: i32, %arg1: memref<128x5xi32, #tpu.memory_space<vmem>>, %arg2: memref<128x128xbf16, #tpu.memory_space<vmem>>, %arg3: memref<640x256xbf16, #tpu.memory_space<vmem>>, %arg4: memref<1x256xf32, #tpu.memory_space<vmem>>, %arg5: memref<128x256xf32, #tpu.memory_space<vmem>>) attributes {dimension_semantics = [#tpu.dimension_semantics<parallel>], iteration_bounds = array<i64: 1>, scalar_prefetch = 0 : i64, scratch_operands = 0 : i64, tpu.core_type = #tpu.core_type<tc>, window_params = [{transform_indices = @transform_0, window_bounds = array<i64: 128, 5>}, {pipeline_mode = #tpu.pipeline_mode<synchronous>, transform_indices = @transform_1, window_bounds = array<i64: 128, 128>}, {pipeline_mode = #tpu.pipeline_mode<synchronous>, transform_indices = @transform_2, window_bounds = array<i64: 640, 256>}, {pipeline_mode = #tpu.pipeline_mode<synchronous>, transform_indices = @transform_3, window_bounds = array<i64: 1, 256>}, {transform_indices = @transform_4, window_bounds = array<i64: 128, 256>}]} {
    %c0 = arith.constant 0 : index
    %c0_0 = arith.constant 0 : index
    %0 = vector.load %arg1[%c0, %c0_0] : memref<128x5xi32, #tpu.memory_space<vmem>>, vector<128x5xi32>
    %c0_1 = arith.constant 0 : index
    %c0_2 = arith.constant 0 : index
    %1 = vector.load %arg2[%c0_1, %c0_2] : memref<128x128xbf16, #tpu.memory_space<vmem>>, vector<128x128xbf16>
    %2 = tpu.iota {dimensions = array<i32: 1>} : vector<128x128xi32>
    %3 = vector.extract_strided_slice %0 {offsets = [0, 0], sizes = [128, 1], strides = [1, 1]} : vector<128x5xi32> to vector<128x1xi32>
    %4 = vector.broadcast %3 : vector<128x1xi32> to vector<128x128xi32>
    %5 = arith.cmpi eq, %2, %4 : vector<128x128xi32>
    %6 = arith.extui %5 : vector<128x128xi1> to vector<128x128xi32>
    %7 = arith.sitofp %6 : vector<128x128xi32> to vector<128x128xf32>
    %8 = arith.truncf %7 : vector<128x128xf32> to vector<128x128xbf16>
    %cst = arith.constant dense<0.000000e+00> : vector<128x128xf32>
    %9 = tpu.matmul %8, %1, %cst {dimension_numbers = #tpu.dot_dimension_numbers<[1], [0], [0], [1], [0, 0, 1, 1], [], []>} : vector<128x128xbf16>, vector<128x128xbf16>, vector<128x128xf32> -> vector<128x128xf32>
    %10 = arith.truncf %9 : vector<128x128xf32> to vector<128x128xbf16>
    %11 = vector.extract_strided_slice %0 {offsets = [0, 1], sizes = [128, 1], strides = [1, 1]} : vector<128x5xi32> to vector<128x1xi32>
    %12 = vector.broadcast %11 : vector<128x1xi32> to vector<128x128xi32>
    %13 = arith.cmpi eq, %2, %12 : vector<128x128xi32>
    %14 = arith.extui %13 : vector<128x128xi1> to vector<128x128xi32>
    %15 = arith.sitofp %14 : vector<128x128xi32> to vector<128x128xf32>
    %16 = arith.truncf %15 : vector<128x128xf32> to vector<128x128xbf16>
    %cst_3 = arith.constant dense<0.000000e+00> : vector<128x128xf32>
    %17 = tpu.matmul %16, %1, %cst_3 {dimension_numbers = #tpu.dot_dimension_numbers<[1], [0], [0], [1], [0, 0, 1, 1], [], []>} : vector<128x128xbf16>, vector<128x128xbf16>, vector<128x128xf32> -> vector<128x128xf32>
    %18 = arith.truncf %17 : vector<128x128xf32> to vector<128x128xbf16>
    %19 = vector.extract_strided_slice %0 {offsets = [0, 2], sizes = [128, 1], strides = [1, 1]} : vector<128x5xi32> to vector<128x1xi32>
    %20 = vector.broadcast %19 : vector<128x1xi32> to vector<128x128xi32>
    %21 = arith.cmpi eq, %2, %20 : vector<128x128xi32>
    %22 = arith.extui %21 : vector<128x128xi1> to vector<128x128xi32>
    %23 = arith.sitofp %22 : vector<128x128xi32> to vector<128x128xf32>
    %24 = arith.truncf %23 : vector<128x128xf32> to vector<128x128xbf16>
    %cst_4 = arith.constant dense<0.000000e+00> : vector<128x128xf32>
    %25 = tpu.matmul %24, %1, %cst_4 {dimension_numbers = #tpu.dot_dimension_numbers<[1], [0], [0], [1], [0, 0, 1, 1], [], []>} : vector<128x128xbf16>, vector<128x128xbf16>, vector<128x128xf32> -> vector<128x128xf32>
    %26 = arith.truncf %25 : vector<128x128xf32> to vector<128x128xbf16>
    %27 = vector.extract_strided_slice %0 {offsets = [0, 3], sizes = [128, 1], strides = [1, 1]} : vector<128x5xi32> to vector<128x1xi32>
    %28 = vector.broadcast %27 : vector<128x1xi32> to vector<128x128xi32>
    %29 = arith.cmpi eq, %2, %28 : vector<128x128xi32>
    %30 = arith.extui %29 : vector<128x128xi1> to vector<128x128xi32>
    %31 = arith.sitofp %30 : vector<128x128xi32> to vector<128x128xf32>
    %32 = arith.truncf %31 : vector<128x128xf32> to vector<128x128xbf16>
    %cst_5 = arith.constant dense<0.000000e+00> : vector<128x128xf32>
    %33 = tpu.matmul %32, %1, %cst_5 {dimension_numbers = #tpu.dot_dimension_numbers<[1], [0], [0], [1], [0, 0, 1, 1], [], []>} : vector<128x128xbf16>, vector<128x128xbf16>, vector<128x128xf32> -> vector<128x128xf32>
    %34 = arith.truncf %33 : vector<128x128xf32> to vector<128x128xbf16>
    %35 = vector.extract_strided_slice %0 {offsets = [0, 4], sizes = [128, 1], strides = [1, 1]} : vector<128x5xi32> to vector<128x1xi32>
    %36 = vector.broadcast %35 : vector<128x1xi32> to vector<128x128xi32>
    %37 = arith.cmpi eq, %2, %36 : vector<128x128xi32>
    %38 = arith.extui %37 : vector<128x128xi1> to vector<128x128xi32>
    %39 = arith.sitofp %38 : vector<128x128xi32> to vector<128x128xf32>
    %40 = arith.truncf %39 : vector<128x128xf32> to vector<128x128xbf16>
    %cst_6 = arith.constant dense<0.000000e+00> : vector<128x128xf32>
    %41 = tpu.matmul %40, %1, %cst_6 {dimension_numbers = #tpu.dot_dimension_numbers<[1], [0], [0], [1], [0, 0, 1, 1], [], []>} : vector<128x128xbf16>, vector<128x128xbf16>, vector<128x128xf32> -> vector<128x128xf32>
    %42 = arith.truncf %41 : vector<128x128xf32> to vector<128x128xbf16>
    %43 = tpu.concatenate %10, %18, %26, %34, %42 in 1 : vector<128x128xbf16>, vector<128x128xbf16>, vector<128x128xbf16>, vector<128x128xbf16>, vector<128x128xbf16> -> vector<128x640xbf16>
    %c0_7 = arith.constant 0 : index
    %c0_8 = arith.constant 0 : index
    %44 = vector.load %arg3[%c0_7, %c0_8] : memref<640x256xbf16, #tpu.memory_space<vmem>>, vector<640x256xbf16>
    %cst_9 = arith.constant dense<0.000000e+00> : vector<128x256xf32>
    %45 = tpu.matmul %43, %44, %cst_9 {dimension_numbers = #tpu.dot_dimension_numbers<[1], [0], [0], [1], [0, 0, 1, 1], [], []>} : vector<128x640xbf16>, vector<640x256xbf16>, vector<128x256xf32> -> vector<128x256xf32>
    %c0_10 = arith.constant 0 : index
    %c0_11 = arith.constant 0 : index
    %46 = vector.load %arg4[%c0_10, %c0_11] : memref<1x256xf32, #tpu.memory_space<vmem>>, vector<1x256xf32>
    %47 = vector.broadcast %46 : vector<1x256xf32> to vector<128x256xf32>
    %48 = arith.addf %45, %47 : vector<128x256xf32>
    %c0_12 = arith.constant 0 : index
    %c0_13 = arith.constant 0 : index
    %49 = vector.load %arg5[%c0_12, %c0_13] : memref<128x256xf32, #tpu.memory_space<vmem>>, vector<128x256xf32>
    tpu.vector_store %arg5[%c0_12, %c0_13], %48 {strides = array<i32>} : memref<128x256xf32, #tpu.memory_space<vmem>>, vector<128x256xf32>,
    return
  }
  func.func @transform_0(%arg0: i32) -> (i32, i32) {
    %c0_i32 = arith.constant 0 : i32
    %c0_i32_0 = arith.constant 0 : i32
    return %arg0, %c0_i32 : i32, i32
  }
  func.func @transform_1(%arg0: i32) -> (i32, i32) {
    %c0_i32 = arith.constant 0 : i32
    %c0_i32_0 = arith.constant 0 : i32
    %c0_i32_1 = arith.constant 0 : i32
    return %c0_i32, %c0_i32_0 : i32, i32
  }
  func.func @transform_2(%arg0: i32) -> (i32, i32) {
    %c0_i32 = arith.constant 0 : i32
    %c0_i32_0 = arith.constant 0 : i32
    %c0_i32_1 = arith.constant 0 : i32
    return %c0_i32, %c0_i32_0 : i32, i32
  }
  func.func @transform_3(%arg0: i32) -> (i32, i32) {
    %c0_i32 = arith.constant 0 : i32
    %c0_i32_0 = arith.constant 0 : i32
    %c0_i32_1 = arith.constant 0 : i32
    return %c0_i32, %c0_i32_0 : i32, i32
  }
  func.func @transform_4(%arg0: i32) -> (i32, i32) {
    %c0_i32 = arith.constant 0 : i32
    %c0_i32_0 = arith.constant 0 : i32
    return %arg0, %c0_i32 : i32, i32
  }
}

</mosaic_0001>

<llo_original>
// kernel: tpu_custom_call.1
$region0: #{tpu_custom_call.1}
  #allocation0 [shape = 'u32[]', space=smem, size = 0x4, offset = 0x4, fixed_abs, tag = 'smem constant byte address 0x4 - core index']
  #allocation1 [shape = 'u32[144,128]{1,0:T(1,128)}', space=vmem, size = 0x12000, scoped, tag = 'internal scratch']
  %s0 = inlined_call_operand.vmem [shape: s32[128,5], index: 0, kind: input, shape index: {}]
  %s1 = inlined_call_operand.vmem [shape: bf16[128,128], index: 1, kind: input, shape index: {}]
  %s2 = inlined_call_operand.hbm [shape: bf16[640,256], index: 2, kind: input, shape index: {}]
  %s3 = inlined_call_operand.vmem [shape: f32[1,256], index: 3, kind: input, shape index: {}]
  %s4 = inlined_call_operand.hbm [shape: f32[128,256], index: 4, kind: output, shape index: {}]
  %s5 = sld [smem:[#allocation0]]
  $region30: #{tpu_custom_call.1} parent=0
    _
  %s7 = ssub.s32 1, %s5
  %s8 = scalar_select 0, %s7, %s5
  $region1: #{tpu_custom_call.1} parent=0
    #allocation2 [shape = 'u8[327680]{0}', space=vmem, size = 0x50000, scoped, tag = 'input window, operand 2, single buffered']
    #allocation3 [shape = 's32[1]{0}', space=sflag, size = 0x4, scoped, tag = 'scoped memory for tpu_custom_call.1']
    #allocation4 [shape = 's32[1]{0}', space=sflag, size = 0x4, scoped, tag = 'scoped memory for tpu_custom_call.1']
    #allocation5 [shape = 'u8[131072]{0}', space=vmem, size = 0x20000, scoped, tag = 'output window, operand 0, single buffered']
    %9 = vsyncpa [#allocation3], 0
    %10 = vsyncpa [#allocation4], 0
    // Predicated region
    $region2: #{tpu_custom_call.1} parent=1 // pred_check
      _
    $region3: #{tpu_custom_call.1} parent=1 // pred_check_branch
      %12 = sbr.rel (0) target = $region5
    $region4: #{tpu_custom_call.1} parent=1 // pred_region
      _
    $region5: #{tpu_custom_call.1} parent=1 // pred_fallthru
      _
    // Predicated region
    $region6: #{tpu_custom_call.1} parent=1 // pred_check
      _
    $region7: #{tpu_custom_call.1} parent=1 // pred_check_branch
      %14 = sbr.rel (0) target = $region9
    $region8: #{tpu_custom_call.1} parent=1 // pred_region
      _
    $region9: #{tpu_custom_call.1} parent=1 // pred_fallthru
      _
    // Predicated region
    $region10: #{tpu_custom_call.1} parent=1 // pred_check
      _
    $region11: #{tpu_custom_call.1} parent=1 // pred_check_branch
      %16 = sbr.rel (0) target = $region13
    $region12: #{tpu_custom_call.1} parent=1 // pred_region
      %s18 = ssub.s32 10240, 10240
      %19 = vsyncadd [#allocation3], %s18
      %s20 = sshll.u32 [#allocation2], 4
      %s21 = int_to_ptr.vmem [resolvable:$true] %s20
      %26 = dma.hbm_to_vmem [thread:$0]  %s2, 10240, %s21, [#allocation3], 128, 128, 8
    $region13: #{tpu_custom_call.1} parent=1 // pred_fallthru
      _
    // Predicated region
    $region14: #{tpu_custom_call.1} parent=1 // pred_check
      _
    $region15: #{tpu_custom_call.1} parent=1 // pred_check_branch
      %28 = sbr.rel (0) target = $region17
    $region16: #{tpu_custom_call.1} parent=1 // pred_region
      _
    $region17: #{tpu_custom_call.1} parent=1 // pred_fallthru
      _
    // Predicated region
    $region18: #{tpu_custom_call.1} parent=1 // pred_check
      _
    $region19: #{tpu_custom_call.1} parent=1 // pred_check_branch
      %30 = sbr.rel (0) target = $region21
    $region20: #{tpu_custom_call.1} parent=1 // pred_region
      %31 = dma.done [#allocation3], 10240
    $region21: #{tpu_custom_call.1} parent=1 // pred_fallthru
      _
    %v33 = vld [vmem:[%s0] sm:$0xff]
    %v34 = vld [vmem:[%s0 + $0x8] sm:$0xff]
    %v35 = vld [vmem:[%s0 + $0x10] sm:$0xff]
    %v36 = vld [vmem:[%s0 + $0x18] sm:$0xff]
    %v37 = vld [vmem:[%s0 + $0x20] sm:$0xff]
    %v38 = vld [vmem:[%s0 + $0x28] sm:$0xff]
    %v39 = vld [vmem:[%s0 + $0x30] sm:$0xff]
    %v40 = vld [vmem:[%s0 + $0x38] sm:$0xff]
    %v41 = vld [vmem:[%s0 + $0x40] sm:$0xff]
    %v42 = vld [vmem:[%s0 + $0x48] sm:$0xff]
    %v43 = vld [vmem:[%s0 + $0x50] sm:$0xff]
    %v44 = vld [vmem:[%s0 + $0x58] sm:$0xff]
    %v45 = vld [vmem:[%s0 + $0x60] sm:$0xff]
    %v46 = vld [vmem:[%s0 + $0x68] sm:$0xff]
    %v47 = vld [vmem:[%s0 + $0x70] sm:$0xff]
    %v48 = vld [vmem:[%s0 + $0x78] sm:$0xff]
    %v49 = vld [vmem:[%s1] sm:$0xf]
    %v50 = vld [vmem:[%s1 + $0x4] sm:$0xf]
    %v51 = vld [vmem:[%s1 + $0x8] sm:$0xf]
    %v52 = vld [vmem:[%s1 + $0xc] sm:$0xf]
    %v53 = vld [vmem:[%s1 + $0x10] sm:$0xf]
    %v54 = vld [vmem:[%s1 + $0x14] sm:$0xf]
    %v55 = vld [vmem:[%s1 + $0x18] sm:$0xf]
    %v56 = vld [vmem:[%s1 + $0x1c] sm:$0xf]
    %v57 = vld [vmem:[%s1 + $0x20] sm:$0xf]
    %v58 = vld [vmem:[%s1 + $0x24] sm:$0xf]
    %v59 = vld [vmem:[%s1 + $0x28] sm:$0xf]
    %v60 = vld [vmem:[%s1 + $0x2c] sm:$0xf]
    %v61 = vld [vmem:[%s1 + $0x30] sm:$0xf]
    %v62 = vld [vmem:[%s1 + $0x34] sm:$0xf]
    %v63 = vld [vmem:[%s1 + $0x38] sm:$0xf]
    %v64 = vld [vmem:[%s1 + $0x3c] sm:$0xf]
    %v65 = vlaneseq
    %v66 = vand.u32 %v65, 127
    %67 = vset.pattern.permute.xlu0 0
    %68 = vperm.xlu0 %67, %v33
    %v69 = vpop.permute.xlu0 %68
    %70 = vset.pattern.permute.xlu0 0
    %71 = vperm.xlu0 %70, %v34
    %v72 = vpop.permute.xlu0 %71
    %73 = vset.pattern.permute.xlu0 0
    %74 = vperm.xlu0 %73, %v35
    %v75 = vpop.permute.xlu0 %74
    %76 = vset.pattern.permute.xlu0 0
    %77 = vperm.xlu0 %76, %v36
    %v78 = vpop.permute.xlu0 %77
    %79 = vset.pattern.permute.xlu0 0
    %80 = vperm.xlu0 %79, %v37
    %v81 = vpop.permute.xlu0 %80
    %82 = vset.pattern.permute.xlu0 0
    %83 = vperm.xlu0 %82, %v38
    %v84 = vpop.permute.xlu0 %83
    %85 = vset.pattern.permute.xlu0 0
    %86 = vperm.xlu0 %85, %v39
    %v87 = vpop.permute.xlu0 %86
    %88 = vset.pattern.permute.xlu0 0
    %89 = vperm.xlu0 %88, %v40
    %v90 = vpop.permute.xlu0 %89
    %91 = vset.pattern.permute.xlu0 0
    %92 = vperm.xlu0 %91, %v41
    %v93 = vpop.permute.xlu0 %92
    %94 = vset.pattern.permute.xlu0 0
    %95 = vperm.xlu0 %94, %v42
    %v96 = vpop.permute.xlu0 %95
    %97 = vset.pattern.permute.xlu0 0
    %98 = vperm.xlu0 %97, %v43
    %v99 = vpop.permute.xlu0 %98
    %100 = vset.pattern.permute.xlu0 0
    %101 = vperm.xlu0 %100, %v44
    %v102 = vpop.permute.xlu0 %101
    %103 = vset.pattern.permute.xlu0 0
    %104 = vperm.xlu0 %103, %v45
    %v105 = vpop.permute.xlu0 %104
    %106 = vset.pattern.permute.xlu0 0
    %107 = vperm.xlu0 %106, %v46
    %v108 = vpop.permute.xlu0 %107
    %109 = vset.pattern.permute.xlu0 0
    %110 = vperm.xlu0 %109, %v47
    %v111 = vpop.permute.xlu0 %110
    %112 = vset.pattern.permute.xlu0 0
    %113 = vperm.xlu0 %112, %v48
    %v114 = vpop.permute.xlu0 %113
    %vm115 = vcmp.eq.s32.totalorder %v66, %v69
    %vm116 = vcmp.eq.s32.totalorder %v66, %v72
    %vm117 = vcmp.eq.s32.totalorder %v66, %v75
    %vm118 = vcmp.eq.s32.totalorder %v66, %v78
    %vm119 = vcmp.eq.s32.totalorder %v66, %v81
    %vm120 = vcmp.eq.s32.totalorder %v66, %v84
    %vm121 = vcmp.eq.s32.totalorder %v66, %v87
    %vm122 = vcmp.eq.s32.totalorder %v66, %v90
    %vm123 = vcmp.eq.s32.totalorder %v66, %v93
    %vm124 = vcmp.eq.s32.totalorder %v66, %v96
    %vm125 = vcmp.eq.s32.totalorder %v66, %v99
    %vm126 = vcmp.eq.s32.totalorder %v66, %v102
    %vm127 = vcmp.eq.s32.totalorder %v66, %v105
    %vm128 = vcmp.eq.s32.totalorder %v66, %v108
    %vm129 = vcmp.eq.s32.totalorder %v66, %v111
    %vm130 = vcmp.eq.s32.totalorder %v66, %v114
    %v131 = vsel %vm115, 1, 0
    %v132 = vsel %vm116, 1, 0
    %v133 = vsel %vm117, 1, 0
    %v134 = vsel %vm118, 1, 0
    %v135 = vsel %vm119, 1, 0
    %v136 = vsel %vm120, 1, 0
    %v137 = vsel %vm121, 1, 0
    %v138 = vsel %vm122, 1, 0
    %v139 = vsel %vm123, 1, 0
    %v140 = vsel %vm124, 1, 0
    %v141 = vsel %vm125, 1, 0
    %v142 = vsel %vm126, 1, 0
    %v143 = vsel %vm127, 1, 0
    %v144 = vsel %vm128, 1, 0
    %v145 = vsel %vm129, 1, 0
    %v146 = vsel %vm130, 1, 0
    %v147 = vcvt.s32.f32 %v131
    %v148 = vcvt.s32.f32 %v132
    %v149 = vcvt.s32.f32 %v133
    %v150 = vcvt.s32.f32 %v134
    %v151 = vcvt.s32.f32 %v135
    %v152 = vcvt.s32.f32 %v136
    %v153 = vcvt.s32.f32 %v137
    %v154 = vcvt.s32.f32 %v138
    %v155 = vcvt.s32.f32 %v139
    %v156 = vcvt.s32.f32 %v140
    %v157 = vcvt.s32.f32 %v141
    %v158 = vcvt.s32.f32 %v142
    %v159 = vcvt.s32.f32 %v143
    %v160 = vcvt.s32.f32 %v144
    %v161 = vcvt.s32.f32 %v145
    %v162 = vcvt.s32.f32 %v146
    %v163 = vpack.c.bf16 %v148, %v147
    %v164 = vpack.c.bf16 %v150, %v149
    %v165 = vpack.c.bf16 %v152, %v151
    %v166 = vpack.c.bf16 %v154, %v153
    %v167 = vpack.c.bf16 %v156, %v155
    %v168 = vpack.c.bf16 %v158, %v157
    %v169 = vpack.c.bf16 %v160, %v159
    %v170 = vpack.c.bf16 %v162, %v161
    %v187 = vunpack.c.l.b16 %v49
    %v188 = vunpack.c.l.b16 %v50
    %v189 = vunpack.c.l.b16 %v51
    %v190 = vunpack.c.l.b16 %v52
    %v191 = vunpack.c.l.b16 %v53
    %v192 = vunpack.c.l.b16 %v54
    %v193 = vunpack.c.l.b16 %v55
    %v194 = vunpack.c.l.b16 %v56
    %v195 = vunpack.c.l.b16 %v57
    %v196 = vunpack.c.l.b16 %v58
    %v197 = vunpack.c.l.b16 %v59
    %v198 = vunpack.c.l.b16 %v60
    %v199 = vunpack.c.l.b16 %v61
    %v200 = vunpack.c.l.b16 %v62
    %v201 = vunpack.c.l.b16 %v63
    %v202 = vunpack.c.l.b16 %v64
    %v203 = vpack.c.b16 %v188, %v187
    %v204 = vpack.c.b16 %v190, %v189
    %v205 = vpack.c.b16 %v192, %v191
    %v206 = vpack.c.b16 %v194, %v193
    %v207 = vpack.c.b16 %v196, %v195
    %v208 = vpack.c.b16 %v198, %v197
    %v209 = vpack.c.b16 %v200, %v199
    %v210 = vpack.c.b16 %v202, %v201
    %219 = vmatprep.subr.bf16.mxu0 0
    %220 = vmatpush1.bf16.msra.mxu0 %v210
    %221 = vmatprep.subr.bf16.mxu0 0
    %222 = vmatpush1.bf16.msra.mxu0 %v209
    %223 = vmatprep.subr.bf16.mxu0 0
    %224 = vmatpush1.bf16.msra.mxu0 %v208
    %225 = vmatprep.subr.bf16.mxu0 0
    %226 = vmatpush1.bf16.msra.mxu0 %v207
    %227 = vmatprep.subr.bf16.mxu0 0
    %228 = vmatpush1.bf16.msra.mxu0 %v206
    %229 = vmatprep.subr.bf16.mxu0 0
    %230 = vmatpush1.bf16.msra.mxu0 %v205
    %231 = vmatprep.subr.bf16.mxu0 0
    %232 = vmatpush1.bf16.msra.mxu0 %v204
    %233 = vmatprep.subr.bf16.mxu0 0
    %234 = vmatpush1.bf16.msra.mxu0 %v203
    %235 = vmatprep.subr.bf16.mxu0 0
    %236 = vmatpush2.bf16.msra.mxu0 0
    %237 = vmatprep.subr.bf16.mxu0 0
    %238 = vmatpush2.bf16.msra.mxu0 0
    %239 = vmatprep.subr.bf16.mxu0 0
    %240 = vmatpush2.bf16.msra.mxu0 0
    %241 = vmatprep.subr.bf16.mxu0 0
    %242 = vmatpush2.bf16.msra.mxu0 0
    %243 = vmatprep.subr.bf16.mxu0 0
    %244 = vmatpush2.bf16.msra.mxu0 0
    %245 = vmatprep.subr.bf16.mxu0 0
    %246 = vmatpush2.bf16.msra.mxu0 0
    %247 = vmatprep.subr.bf16.mxu0 0
    %248 = vmatpush2.bf16.msra.mxu0 0
    %249 = vmatprep.subr.bf16.mxu0 0
    %250 = vmatpush2.bf16.msra.mxu0 0
    %251 = vmatprep.mubr.bf16.mxu0 0
    %252 = vmatmul.mubr.bf16.gmra.mxu0 %v163
    %v253 = vpop.f32.mrf.mxu0
    %v254 = vadd.f32 0.0, %v253
    %v255 = vpop.f32.mrf.mxu0
    %v256 = vpop.f32.mrf.mxu0
    %v257 = vadd.f32 0.0, %v256
    %v258 = vpop.f32.mrf.mxu0
    %259 = vmatprep.mubr.bf16.mxu0 0
    %260 = vmatmul.mubr.bf16.gmra.mxu0 %v164
    %v261 = vpop.f32.mrf.mxu0
    %v262 = vadd.f32 0.0, %v261
    %v263 = vpop.f32.mrf.mxu0
    %v264 = vpop.f32.mrf.mxu0
    %v265 = vadd.f32 0.0, %v264
    %v266 = vpop.f32.mrf.mxu0
    %267 = vmatprep.mubr.bf16.mxu0 0
    %268 = vmatmul.mubr.bf16.gmra.mxu0 %v165
    %v269 = vpop.f32.mrf.mxu0
    %v270 = vadd.f32 0.0, %v269
    %v271 = vpop.f32.mrf.mxu0
    %v272 = vpop.f32.mrf.mxu0
    %v273 = vadd.f32 0.0, %v272
    %v274 = vpop.f32.mrf.mxu0
    %275 = vmatprep.mubr.bf16.mxu0 0
    %276 = vmatmul.mubr.bf16.gmra.mxu0 %v166
    %v277 = vpop.f32.mrf.mxu0
    %v278 = vadd.f32 0.0, %v277
    %v279 = vpop.f32.mrf.mxu0
    %v280 = vpop.f32.mrf.mxu0
    %v281 = vadd.f32 0.0, %v280
    %v282 = vpop.f32.mrf.mxu0
    %283 = vmatprep.mubr.bf16.mxu0 0
    %284 = vmatmul.mubr.bf16.gmra.mxu0 %v167
    %v285 = vpop.f32.mrf.mxu0
    %v286 = vadd.f32 0.0, %v285
    %v287 = vpop.f32.mrf.mxu0
    %v288 = vpop.f32.mrf.mxu0
    %v289 = vadd.f32 0.0, %v288
    %v290 = vpop.f32.mrf.mxu0
    %291 = vmatprep.mubr.bf16.mxu0 0
    %292 = vmatmul.mubr.bf16.gmra.mxu0 %v168
    %v293 = vpop.f32.mrf.mxu0
    %v294 = vadd.f32 0.0, %v293
    %v295 = vpop.f32.mrf.mxu0
    %v296 = vpop.f32.mrf.mxu0
    %v297 = vadd.f32 0.0, %v296
    %v298 = vpop.f32.mrf.mxu0
    %299 = vmatprep.mubr.bf16.mxu0 0
    %300 = vmatmul.mubr.bf16.gmra.mxu0 %v169
    %v301 = vpop.f32.mrf.mxu0
    %v302 = vadd.f32 0.0, %v301
    %v303 = vpop.f32.mrf.mxu0
    %v304 = vpop.f32.mrf.mxu0
    %v305 = vadd.f32 0.0, %v304
    %v306 = vpop.f32.mrf.mxu0
    %307 = vmatprep.mubr.bf16.mxu0 0
    %308 = vmatmul.mubr.bf16.gmra.mxu0 %v170
    %v309 = vpop.f32.mrf.mxu0
    %v310 = vadd.f32 0.0, %v309
    %v311 = vpop.f32.mrf.mxu0
    %v312 = vpop.f32.mrf.mxu0
    %v313 = vadd.f32 0.0, %v312
    %v314 = vpop.f32.mrf.mxu0
    %315 = vdwg.mxu0
    %v316 = vpack.c.bf16 %v257, %v254
    %v317 = vpack.c.bf16 %v265, %v262
    %v318 = vpack.c.bf16 %v273, %v270
    %v319 = vpack.c.bf16 %v281, %v278
    %v320 = vpack.c.bf16 %v289, %v286
    %v321 = vpack.c.bf16 %v297, %v294
    %v322 = vpack.c.bf16 %v305, %v302
    %v323 = vpack.c.bf16 %v313, %v310
    %324 = vset.pattern.permute.xlu0 1
    %325 = vperm.xlu0 %324, %v33
    %v326 = vpop.permute.xlu0 %325
    %327 = vset.pattern.permute.xlu0 1
    %328 = vperm.xlu0 %327, %v34
    %v329 = vpop.permute.xlu0 %328
    %330 = vset.pattern.permute.xlu0 1
    %331 = vperm.xlu0 %330, %v35
    %v332 = vpop.permute.xlu0 %331
    %333 = vset.pattern.permute.xlu0 1
    %334 = vperm.xlu0 %333, %v36
    %v335 = vpop.permute.xlu0 %334
    %336 = vset.pattern.permute.xlu0 1
    %337 = vperm.xlu0 %336, %v37
    %v338 = vpop.permute.xlu0 %337
    %339 = vset.pattern.permute.xlu0 1
    %340 = vperm.xlu0 %339, %v38
    %v341 = vpop.permute.xlu0 %340
    %342 = vset.pattern.permute.xlu0 1
    %343 = vperm.xlu0 %342, %v39
    %v344 = vpop.permute.xlu0 %343
    %345 = vset.pattern.permute.xlu0 1
    %346 = vperm.xlu0 %345, %v40
    %v347 = vpop.permute.xlu0 %346
    %348 = vset.pattern.permute.xlu0 1
    %349 = vperm.xlu0 %348, %v41
    %v350 = vpop.permute.xlu0 %349
    %351 = vset.pattern.permute.xlu0 1
    %352 = vperm.xlu0 %351, %v42
    %v353 = vpop.permute.xlu0 %352
    %354 = vset.pattern.permute.xlu0 1
    %355 = vperm.xlu0 %354, %v43
    %v356 = vpop.permute.xlu0 %355
    %357 = vset.pattern.permute.xlu0 1
    %358 = vperm.xlu0 %357, %v44
    %v359 = vpop.permute.xlu0 %358
    %360 = vset.pattern.permute.xlu0 1
    %361 = vperm.xlu0 %360, %v45
    %v362 = vpop.permute.xlu0 %361
    %363 = vset.pattern.permute.xlu0 1
    %364 = vperm.xlu0 %363, %v46
    %v365 = vpop.permute.xlu0 %364
    %366 = vset.pattern.permute.xlu0 1
    %367 = vperm.xlu0 %366, %v47
    %v368 = vpop.permute.xlu0 %367
    %369 = vset.pattern.permute.xlu0 1
    %370 = vperm.xlu0 %369, %v48
    %v371 = vpop.permute.xlu0 %370
    %vm372 = vcmp.eq.s32.totalorder %v66, %v326
    %vm373 = vcmp.eq.s32.totalorder %v66, %v329
    %vm374 = vcmp.eq.s32.totalorder %v66, %v332
    %vm375 = vcmp.eq.s32.totalorder %v66, %v335
    %vm376 = vcmp.eq.s32.totalorder %v66, %v338
    %vm377 = vcmp.eq.s32.totalorder %v66, %v341
    %vm378 = vcmp.eq.s32.totalorder %v66, %v344
    %vm379 = vcmp.eq.s32.totalorder %v66, %v347
    %vm380 = vcmp.eq.s32.totalorder %v66, %v350
    %vm381 = vcmp.eq.s32.totalorder %v66, %v353
    %vm382 = vcmp.eq.s32.totalorder %v66, %v356
    %vm383 = vcmp.eq.s32.totalorder %v66, %v359
    %vm384 = vcmp.eq.s32.totalorder %v66, %v362
    %vm385 = vcmp.eq.s32.totalorder %v66, %v365
    %vm386 = vcmp.eq.s32.totalorder %v66, %v368
    %vm387 = vcmp.eq.s32.totalorder %v66, %v371
    %v388 = vsel %vm372, 1, 0
    %v389 = vsel %vm373, 1, 0
    %v390 = vsel %vm374, 1, 0
    %v391 = vsel %vm375, 1, 0
    %v392 = vsel %vm376, 1, 0
    %v393 = vsel %vm377, 1, 0
    %v394 = vsel %vm378, 1, 0
    %v395 = vsel %vm379, 1, 0
    %v396 = vsel %vm380, 1, 0
    %v397 = vsel %vm381, 1, 0
    %v398 = vsel %vm382, 1, 0
    %v399 = vsel %vm383, 1, 0
    %v400 = vsel %vm384, 1, 0
    %v401 = vsel %vm385, 1, 0
    %v402 = vsel %vm386, 1, 0
    %v403 = vsel %vm387, 1, 0
    %v404 = vcvt.s32.f32 %v388
    %v405 = vcvt.s32.f32 %v389
    %v406 = vcvt.s32.f32 %v390
    %v407 = vcvt.s32.f32 %v391
    %v408 = vcvt.s32.f32 %v392
    %v409 = vcvt.s32.f32 %v393
    %v410 = vcvt.s32.f32 %v394
    %v411 = vcvt.s32.f32 %v395
    %v412 = vcvt.s32.f32 %v396
    %v413 = vcvt.s32.f32 %v397
    %v414 = vcvt.s32.f32 %v398
    %v415 = vcvt.s32.f32 %v399
    %v416 = vcvt.s32.f32 %v400
    %v417 = vcvt.s32.f32 %v401
    %v418 = vcvt.s32.f32 %v402
    %v419 = vcvt.s32.f32 %v403
    %v420 = vpack.c.bf16 %v405, %v404
    %v421 = vpack.c.bf16 %v407, %v406
    %v422 = vpack.c.bf16 %v409, %v408
    %v423 = vpack.c.bf16 %v411, %v410
    %v424 = vpack.c.bf16 %v413, %v412
    %v425 = vpack.c.bf16 %v415, %v414
    %v426 = vpack.c.bf16 %v417, %v416
    %v427 = vpack.c.bf16 %v419, %v418
    %428 = vmatprep.subr.bf16.mxu0 0
    %429 = vmatpush1.bf16.msra.mxu0 %v210
    %430 = vmatprep.subr.bf16.mxu0 0
    %431 = vmatpush1.bf16.msra.mxu0 %v209
    %432 = vmatprep.subr.bf16.mxu0 0
    %433 = vmatpush1.bf16.msra.mxu0 %v208
    %434 = vmatprep.subr.bf16.mxu0 0
    %435 = vmatpush1.bf16.msra.mxu0 %v207
    %436 = vmatprep.subr.bf16.mxu0 0
    %437 = vmatpush1.bf16.msra.mxu0 %v206
    %438 = vmatprep.subr.bf16.mxu0 0
    %439 = vmatpush1.bf16.msra.mxu0 %v205
    %440 = vmatprep.subr.bf16.mxu0 0
    %441 = vmatpush1.bf16.msra.mxu0 %v204
    %442 = vmatprep.subr.bf16.mxu0 0
    %443 = vmatpush1.bf16.msra.mxu0 %v203
    %444 = vmatprep.subr.bf16.mxu0 0
    %445 = vmatpush2.bf16.msra.mxu0 0
    %446 = vmatprep.subr.bf16.mxu0 0
    %447 = vmatpush2.bf16.msra.mxu0 0
    %448 = vmatprep.subr.bf16.mxu0 0
    %449 = vmatpush2.bf16.msra.mxu0 0
    %450 = vmatprep.subr.bf16.mxu0 0
    %451 = vmatpush2.bf16.msra.mxu0 0
    %452 = vmatprep.subr.bf16.mxu0 0
    %453 = vmatpush2.bf16.msra.mxu0 0
    %454 = vmatprep.subr.bf16.mxu0 0
    %455 = vmatpush2.bf16.msra.mxu0 0
    %456 = vmatprep.subr.bf16.mxu0 0
    %457 = vmatpush2.bf16.msra.mxu0 0
    %458 = vmatprep.subr.bf16.mxu0 0
    %459 = vmatpush2.bf16.msra.mxu0 0
    %460 = vmatprep.mubr.bf16.mxu0 0
    %461 = vmatmul.mubr.bf16.gmra.mxu0 %v420
    %v462 = vpop.f32.mrf.mxu0
    %v463 = vadd.f32 0.0, %v462
    %v464 = vpop.f32.mrf.mxu0
    %v465 = vpop.f32.mrf.mxu0
    %v466 = vadd.f32 0.0, %v465
    %v467 = vpop.f32.mrf.mxu0
    %468 = vmatprep.mubr.bf16.mxu0 0
    %469 = vmatmul.mubr.bf16.gmra.mxu0 %v421
    %v470 = vpop.f32.mrf.mxu0
    %v471 = vadd.f32 0.0, %v470
    %v472 = vpop.f32.mrf.mxu0
    %v473 = vpop.f32.mrf.mxu0
    %v474 = vadd.f32 0.0, %v473
    %v475 = vpop.f32.mrf.mxu0
    %476 = vmatprep.mubr.bf16.mxu0 0
    %477 = vmatmul.mubr.bf16.gmra.mxu0 %v422
    %v478 = vpop.f32.mrf.mxu0
    %v479 = vadd.f32 0.0, %v478
    %v480 = vpop.f32.mrf.mxu0
    %v481 = vpop.f32.mrf.mxu0
    %v482 = vadd.f32 0.0, %v481
    %v483 = vpop.f32.mrf.mxu0
    %484 = vmatprep.mubr.bf16.mxu0 0
    %485 = vmatmul.mubr.bf16.gmra.mxu0 %v423
    %v486 = vpop.f32.mrf.mxu0
    %v487 = vadd.f32 0.0, %v486
    %v488 = vpop.f32.mrf.mxu0
    %v489 = vpop.f32.mrf.mxu0
    %v490 = vadd.f32 0.0, %v489
    %v491 = vpop.f32.mrf.mxu0
    %492 = vmatprep.mubr.bf16.mxu0 0
    %493 = vmatmul.mubr.bf16.gmra.mxu0 %v424
    %v494 = vpop.f32.mrf.mxu0
    %v495 = vadd.f32 0.0, %v494
    %v496 = vpop.f32.mrf.mxu0
    %v497 = vpop.f32.mrf.mxu0
    %v498 = vadd.f32 0.0, %v497
    %v499 = vpop.f32.mrf.mxu0
    %500 = vmatprep.mubr.bf16.mxu0 0
    %501 = vmatmul.mubr.bf16.gmra.mxu0 %v425
    %v502 = vpop.f32.mrf.mxu0
    %v503 = vadd.f32 0.0, %v502
    %v504 = vpop.f32.mrf.mxu0
    %v505 = vpop.f32.mrf.mxu0
    %v506 = vadd.f32 0.0, %v505
    %v507 = vpop.f32.mrf.mxu0
    %508 = vmatprep.mubr.bf16.mxu0 0
    %509 = vmatmul.mubr.bf16.gmra.mxu0 %v426
    %v510 = vpop.f32.mrf.mxu0
    %v511 = vadd.f32 0.0, %v510
    %v512 = vpop.f32.mrf.mxu0
    %v513 = vpop.f32.mrf.mxu0
    %v514 = vadd.f32 0.0, %v513
    %v515 = vpop.f32.mrf.mxu0
    %516 = vmatprep.mubr.bf16.mxu0 0
    %517 = vmatmul.mubr.bf16.gmra.mxu0 %v427
    %v518 = vpop.f32.mrf.mxu0
    %v519 = vadd.f32 0.0, %v518
    %v520 = vpop.f32.mrf.mxu0
    %v521 = vpop.f32.mrf.mxu0
    %v522 = vadd.f32 0.0, %v521
    %v523 = vpop.f32.mrf.mxu0
    %524 = vdwg.mxu0
    %v525 = vpack.c.bf16 %v466, %v463
    %v526 = vpack.c.bf16 %v474, %v471
    %v527 = vpack.c.bf16 %v482, %v479
    %v528 = vpack.c.bf16 %v490, %v487
    %v529 = vpack.c.bf16 %v498, %v495
    %v530 = vpack.c.bf16 %v506, %v503
    %v531 = vpack.c.bf16 %v514, %v511
    %v532 = vpack.c.bf16 %v522, %v519
    %533 = vset.pattern.permute.xlu0 2
    %534 = vperm.xlu0 %533, %v33
    %v535 = vpop.permute.xlu0 %534
    %536 = vset.pattern.permute.xlu0 2
    %537 = vperm.xlu0 %536, %v34
    %v538 = vpop.permute.xlu0 %537
    %539 = vset.pattern.permute.xlu0 2
    %540 = vperm.xlu0 %539, %v35
    %v541 = vpop.permute.xlu0 %540
    %542 = vset.pattern.permute.xlu0 2
    %543 = vperm.xlu0 %542, %v36
    %v544 = vpop.permute.xlu0 %543
    %545 = vset.pattern.permute.xlu0 2
    %546 = vperm.xlu0 %545, %v37
    %v547 = vpop.permute.xlu0 %546
    %548 = vset.pattern.permute.xlu0 2
    %549 = vperm.xlu0 %548, %v38
    %v550 = vpop.permute.xlu0 %549
    %551 = vset.pattern.permute.xlu0 2
    %552 = vperm.xlu0 %551, %v39
    %v553 = vpop.permute.xlu0 %552
    %554 = vset.pattern.permute.xlu0 2
    %555 = vperm.xlu0 %554, %v40
    %v556 = vpop.permute.xlu0 %555
    %557 = vset.pattern.permute.xlu0 2
    %558 = vperm.xlu0 %557, %v41
    %v559 = vpop.permute.xlu0 %558
    %560 = vset.pattern.permute.xlu0 2
    %561 = vperm.xlu0 %560, %v42
    %v562 = vpop.permute.xlu0 %561
    %563 = vset.pattern.permute.xlu0 2
    %564 = vperm.xlu0 %563, %v43
    %v565 = vpop.permute.xlu0 %564
    %566 = vset.pattern.permute.xlu0 2
    %567 = vperm.xlu0 %566, %v44
    %v568 = vpop.permute.xlu0 %567
    %569 = vset.pattern.permute.xlu0 2
    %570 = vperm.xlu0 %569, %v45
    %v571 = vpop.permute.xlu0 %570
    %572 = vset.pattern.permute.xlu0 2
    %573 = vperm.xlu0 %572, %v46
    %v574 = vpop.permute.xlu0 %573
    %575 = vset.pattern.permute.xlu0 2
    %576 = vperm.xlu0 %575, %v47
    %v577 = vpop.permute.xlu0 %576
    %578 = vset.pattern.permute.xlu0 2
    %579 = vperm.xlu0 %578, %v48
    %v580 = vpop.permute.xlu0 %579
    %vm581 = vcmp.eq.s32.totalorder %v66, %v535
    %vm582 = vcmp.eq.s32.totalorder %v66, %v538
    %vm583 = vcmp.eq.s32.totalorder %v66, %v541
    %vm584 = vcmp.eq.s32.totalorder %v66, %v544
    %vm585 = vcmp.eq.s32.totalorder %v66, %v547
    %vm586 = vcmp.eq.s32.totalorder %v66, %v550
    %vm587 = vcmp.eq.s32.totalorder %v66, %v553
    %vm588 = vcmp.eq.s32.totalorder %v66, %v556
    %vm589 = vcmp.eq.s32.totalorder %v66, %v559
    %vm590 = vcmp.eq.s32.totalorder %v66, %v562
    %vm591 = vcmp.eq.s32.totalorder %v66, %v565
    %vm592 = vcmp.eq.s32.totalorder %v66, %v568
    %vm593 = vcmp.eq.s32.totalorder %v66, %v571
    %vm594 = vcmp.eq.s32.totalorder %v66, %v574
    %vm595 = vcmp.eq.s32.totalorder %v66, %v577
    %vm596 = vcmp.eq.s32.totalorder %v66, %v580
    %v597 = vsel %vm581, 1, 0
    %v598 = vsel %vm582, 1, 0
    %v599 = vsel %vm583, 1, 0
    %v600 = vsel %vm584, 1, 0
    %v601 = vsel %vm585, 1, 0
    %v602 = vsel %vm586, 1, 0
    %v603 = vsel %vm587, 1, 0
    %v604 = vsel %vm588, 1, 0
    %v605 = vsel %vm589, 1, 0
    %v606 = vsel %vm590, 1, 0
    %v607 = vsel %vm591, 1, 0
    %v608 = vsel %vm592, 1, 0
    %v609 = vsel %vm593, 1, 0
    %v610 = vsel %vm594, 1, 0
    %v611 = vsel %vm595, 1, 0
    %v612 = vsel %vm596, 1, 0
    %v613 = vcvt.s32.f32 %v597
    %v614 = vcvt.s32.f32 %v598
    %v615 = vcvt.s32.f32 %v599
    %v616 = vcvt.s32.f32 %v600
    %v617 = vcvt.s32.f32 %v601
    %v618 = vcvt.s32.f32 %v602
    %v619 = vcvt.s32.f32 %v603
    %v620 = vcvt.s32.f32 %v604
    %v621 = vcvt.s32.f32 %v605
    %v622 = vcvt.s32.f32 %v606
    %v623 = vcvt.s32.f32 %v607
    %v624 = vcvt.s32.f32 %v608
    %v625 = vcvt.s32.f32 %v609
    %v626 = vcvt.s32.f32 %v610
    %v627 = vcvt.s32.f32 %v611
    %v628 = vcvt.s32.f32 %v612
    %v629 = vpack.c.bf16 %v614, %v613
    %v630 = vpack.c.bf16 %v616, %v615
    %v631 = vpack.c.bf16 %v618, %v617
    %v632 = vpack.c.bf16 %v620, %v619
    %v633 = vpack.c.bf16 %v622, %v621
    %v634 = vpack.c.bf16 %v624, %v623
    %v635 = vpack.c.bf16 %v626, %v625
    %v636 = vpack.c.bf16 %v628, %v627
    %637 = vmatprep.subr.bf16.mxu0 0
    %638 = vmatpush1.bf16.msra.mxu0 %v210
    %639 = vmatprep.subr.bf16.mxu0 0
    %640 = vmatpush1.bf16.msra.mxu0 %v209
    %641 = vmatprep.subr.bf16.mxu0 0
    %642 = vmatpush1.bf16.msra.mxu0 %v208
    %643 = vmatprep.subr.bf16.mxu0 0
    %644 = vmatpush1.bf16.msra.mxu0 %v207
    %645 = vmatprep.subr.bf16.mxu0 0
    %646 = vmatpush1.bf16.msra.mxu0 %v206
    %647 = vmatprep.subr.bf16.mxu0 0
    %648 = vmatpush1.bf16.msra.mxu0 %v205
    %649 = vmatprep.subr.bf16.mxu0 0
    %650 = vmatpush1.bf16.msra.mxu0 %v204
    %651 = vmatprep.subr.bf16.mxu0 0
    %652 = vmatpush1.bf16.msra.mxu0 %v203
    %653 = vmatprep.subr.bf16.mxu0 0
    %654 = vmatpush2.bf16.msra.mxu0 0
    %655 = vmatprep.subr.bf16.mxu0 0
    %656 = vmatpush2.bf16.msra.mxu0 0
    %657 = vmatprep.subr.bf16.mxu0 0
    %658 = vmatpush2.bf16.msra.mxu0 0
    %659 = vmatprep.subr.bf16.mxu0 0
    %660 = vmatpush2.bf16.msra.mxu0 0
    %661 = vmatprep.subr.bf16.mxu0 0
    %662 = vmatpush2.bf16.msra.mxu0 0
    %663 = vmatprep.subr.bf16.mxu0 0
    %664 = vmatpush2.bf16.msra.mxu0 0
    %665 = vmatprep.subr.bf16.mxu0 0
    %666 = vmatpush2.bf16.msra.mxu0 0
    %667 = vmatprep.subr.bf16.mxu0 0
    %668 = vmatpush2.bf16.msra.mxu0 0
    %669 = vmatprep.mubr.bf16.mxu0 0
    %670 = vmatmul.mubr.bf16.gmra.mxu0 %v629
    %v671 = vpop.f32.mrf.mxu0
    %v672 = vadd.f32 0.0, %v671
    %v673 = vpop.f32.mrf.mxu0
    %v674 = vpop.f32.mrf.mxu0
    %v675 = vadd.f32 0.0, %v674
    %v676 = vpop.f32.mrf.mxu0
    %677 = vmatprep.mubr.bf16.mxu0 0
    %678 = vmatmul.mubr.bf16.gmra.mxu0 %v630
    %v679 = vpop.f32.mrf.mxu0
    %v680 = vadd.f32 0.0, %v679
    %v681 = vpop.f32.mrf.mxu0
    %v682 = vpop.f32.mrf.mxu0
    %v683 = vadd.f32 0.0, %v682
    %v684 = vpop.f32.mrf.mxu0
    %685 = vmatprep.mubr.bf16.mxu0 0
    %686 = vmatmul.mubr.bf16.gmra.mxu0 %v631
    %v687 = vpop.f32.mrf.mxu0
    %v688 = vadd.f32 0.0, %v687
    %v689 = vpop.f32.mrf.mxu0
    %v690 = vpop.f32.mrf.mxu0
    %v691 = vadd.f32 0.0, %v690
    %v692 = vpop.f32.mrf.mxu0
    %693 = vmatprep.mubr.bf16.mxu0 0
    %694 = vmatmul.mubr.bf16.gmra.mxu0 %v632
    %v695 = vpop.f32.mrf.mxu0
    %v696 = vadd.f32 0.0, %v695
    %v697 = vpop.f32.mrf.mxu0
    %v698 = vpop.f32.mrf.mxu0
    %v699 = vadd.f32 0.0, %v698
    %v700 = vpop.f32.mrf.mxu0
    %701 = vmatprep.mubr.bf16.mxu0 0
    %702 = vmatmul.mubr.bf16.gmra.mxu0 %v633
    %v703 = vpop.f32.mrf.mxu0
    %v704 = vadd.f32 0.0, %v703
    %v705 = vpop.f32.mrf.mxu0
    %v706 = vpop.f32.mrf.mxu0
    %v707 = vadd.f32 0.0, %v706
    %v708 = vpop.f32.mrf.mxu0
    %709 = vmatprep.mubr.bf16.mxu0 0
    %710 = vmatmul.mubr.bf16.gmra.mxu0 %v634
    %v711 = vpop.f32.mrf.mxu0
    %v712 = vadd.f32 0.0, %v711
    %v713 = vpop.f32.mrf.mxu0
    %v714 = vpop.f32.mrf.mxu0
    %v715 = vadd.f32 0.0, %v714
    %v716 = vpop.f32.mrf.mxu0
    %717 = vmatprep.mubr.bf16.mxu0 0
    %718 = vmatmul.mubr.bf16.gmra.mxu0 %v635
    %v719 = vpop.f32.mrf.mxu0
    %v720 = vadd.f32 0.0, %v719
    %v721 = vpop.f32.mrf.mxu0
    %v722 = vpop.f32.mrf.mxu0
    %v723 = vadd.f32 0.0, %v722
    %v724 = vpop.f32.mrf.mxu0
    %725 = vmatprep.mubr.bf16.mxu0 0
    %726 = vmatmul.mubr.bf16.gmra.mxu0 %v636
    %v727 = vpop.f32.mrf.mxu0
    %v728 = vadd.f32 0.0, %v727
    %v729 = vpop.f32.mrf.mxu0
    %v730 = vpop.f32.mrf.mxu0
    %v731 = vadd.f32 0.0, %v730
    %v732 = vpop.f32.mrf.mxu0
    %733 = vdwg.mxu0
    %v734 = vpack.c.bf16 %v675, %v672
    %v735 = vpack.c.bf16 %v683, %v680
    %v736 = vpack.c.bf16 %v691, %v688
    %v737 = vpack.c.bf16 %v699, %v696
    %v738 = vpack.c.bf16 %v707, %v704
    %v739 = vpack.c.bf16 %v715, %v712
    %v740 = vpack.c.bf16 %v723, %v720
    %v741 = vpack.c.bf16 %v731, %v728
    %742 = vset.pattern.permute.xlu0 3
    %743 = vperm.xlu0 %742, %v33
    %v744 = vpop.permute.xlu0 %743
    %745 = vset.pattern.permute.xlu0 3
    %746 = vperm.xlu0 %745, %v34
    %v747 = vpop.permute.xlu0 %746
    %748 = vset.pattern.permute.xlu0 3
    %749 = vperm.xlu0 %748, %v35
    %v750 = vpop.permute.xlu0 %749
    %751 = vset.pattern.permute.xlu0 3
    %752 = vperm.xlu0 %751, %v36
    %v753 = vpop.permute.xlu0 %752
    %754 = vset.pattern.permute.xlu0 3
    %755 = vperm.xlu0 %754, %v37
    %v756 = vpop.permute.xlu0 %755
    %757 = vset.pattern.permute.xlu0 3
    %758 = vperm.xlu0 %757, %v38
    %v759 = vpop.permute.xlu0 %758
    %760 = vset.pattern.permute.xlu0 3
    %761 = vperm.xlu0 %760, %v39
    %v762 = vpop.permute.xlu0 %761
    %763 = vset.pattern.permute.xlu0 3
    %764 = vperm.xlu0 %763, %v40
    %v765 = vpop.permute.xlu0 %764
    %766 = vset.pattern.permute.xlu0 3
    %767 = vperm.xlu0 %766, %v41
    %v768 = vpop.permute.xlu0 %767
    %769 = vset.pattern.permute.xlu0 3
    %770 = vperm.xlu0 %769, %v42
    %v771 = vpop.permute.xlu0 %770
    %772 = vset.pattern.permute.xlu0 3
    %773 = vperm.xlu0 %772, %v43
    %v774 = vpop.permute.xlu0 %773
    %775 = vset.pattern.permute.xlu0 3
    %776 = vperm.xlu0 %775, %v44
    %v777 = vpop.permute.xlu0 %776
    %778 = vset.pattern.permute.xlu0 3
    %779 = vperm.xlu0 %778, %v45
    %v780 = vpop.permute.xlu0 %779
    %781 = vset.pattern.permute.xlu0 3
    %782 = vperm.xlu0 %781, %v46
    %v783 = vpop.permute.xlu0 %782
    %784 = vset.pattern.permute.xlu0 3
    %785 = vperm.xlu0 %784, %v47
    %v786 = vpop.permute.xlu0 %785
    %787 = vset.pattern.permute.xlu0 3
    %788 = vperm.xlu0 %787, %v48
    %v789 = vpop.permute.xlu0 %788
    %vm790 = vcmp.eq.s32.totalorder %v66, %v744
    %vm791 = vcmp.eq.s32.totalorder %v66, %v747
    %vm792 = vcmp.eq.s32.totalorder %v66, %v750
    %vm793 = vcmp.eq.s32.totalorder %v66, %v753
    %vm794 = vcmp.eq.s32.totalorder %v66, %v756
    %vm795 = vcmp.eq.s32.totalorder %v66, %v759
    %vm796 = vcmp.eq.s32.totalorder %v66, %v762
    %vm797 = vcmp.eq.s32.totalorder %v66, %v765
    %vm798 = vcmp.eq.s32.totalorder %v66, %v768
    %vm799 = vcmp.eq.s32.totalorder %v66, %v771
    %vm800 = vcmp.eq.s32.totalorder %v66, %v774
    %vm801 = vcmp.eq.s32.totalorder %v66, %v777
    %vm802 = vcmp.eq.s32.totalorder %v66, %v780
    %vm803 = vcmp.eq.s32.totalorder %v66, %v783
    %vm804 = vcmp.eq.s32.totalorder %v66, %v786
    %vm805 = vcmp.eq.s32.totalorder %v66, %v789
    %v806 = vsel %vm790, 1, 0
    %v807 = vsel %vm791, 1, 0
    %v808 = vsel %vm792, 1, 0
    %v809 = vsel %vm793, 1, 0
    %v810 = vsel %vm794, 1, 0
    %v811 = vsel %vm795, 1, 0
    %v812 = vsel %vm796, 1, 0
    %v813 = vsel %vm797, 1, 0
    %v814 = vsel %vm798, 1, 0
    %v815 = vsel %vm799, 1, 0
    %v816 = vsel %vm800, 1, 0
    %v817 = vsel %vm801, 1, 0
    %v818 = vsel %vm802, 1, 0
    %v819 = vsel %vm803, 1, 0
    %v820 = vsel %vm804, 1, 0
    %v821 = vsel %vm805, 1, 0
    %v822 = vcvt.s32.f32 %v806
    %v823 = vcvt.s32.f32 %v807
    %v824 = vcvt.s32.f32 %v808
    %v825 = vcvt.s32.f32 %v809
    %v826 = vcvt.s32.f32 %v810
    %v827 = vcvt.s32.f32 %v811
    %v828 = vcvt.s32.f32 %v812
    %v829 = vcvt.s32.f32 %v813
    %v830 = vcvt.s32.f32 %v814
    %v831 = vcvt.s32.f32 %v815
    %v832 = vcvt.s32.f32 %v816
    %v833 = vcvt.s32.f32 %v817
    %v834 = vcvt.s32.f32 %v818
    %v835 = vcvt.s32.f32 %v819
    %v836 = vcvt.s32.f32 %v820
    %v837 = vcvt.s32.f32 %v821
    %v838 = vpack.c.bf16 %v823, %v822
    %v839 = vpack.c.bf16 %v825, %v824
    %v840 = vpack.c.bf16 %v827, %v826
    %v841 = vpack.c.bf16 %v829, %v828
    %v842 = vpack.c.bf16 %v831, %v830
    %v843 = vpack.c.bf16 %v833, %v832
    %v844 = vpack.c.bf16 %v835, %v834
    %v845 = vpack.c.bf16 %v837, %v836
    %846 = vmatprep.subr.bf16.mxu0 0
    %847 = vmatpush1.bf16.msra.mxu0 %v210
    %848 = vmatprep.subr.bf16.mxu0 0
    %849 = vmatpush1.bf16.msra.mxu0 %v209
    %850 = vmatprep.subr.bf16.mxu0 0
    %851 = vmatpush1.bf16.msra.mxu0 %v208
    %852 = vmatprep.subr.bf16.mxu0 0
    %853 = vmatpush1.bf16.msra.mxu0 %v207
    %854 = vmatprep.subr.bf16.mxu0 0
    %855 = vmatpush1.bf16.msra.mxu0 %v206
    %856 = vmatprep.subr.bf16.mxu0 0
    %857 = vmatpush1.bf16.msra.mxu0 %v205
    %858 = vmatprep.subr.bf16.mxu0 0
    %859 = vmatpush1.bf16.msra.mxu0 %v204
    %860 = vmatprep.subr.bf16.mxu0 0
    %861 = vmatpush1.bf16.msra.mxu0 %v203
    %862 = vmatprep.subr.bf16.mxu0 0
    %863 = vmatpush2.bf16.msra.mxu0 0
    %864 = vmatprep.subr.bf16.mxu0 0
    %865 = vmatpush2.bf16.msra.mxu0 0
    %866 = vmatprep.subr.bf16.mxu0 0
    %867 = vmatpush2.bf16.msra.mxu0 0
    %868 = vmatprep.subr.bf16.mxu0 0
    %869 = vmatpush2.bf16.msra.mxu0 0
    %870 = vmatprep.subr.bf16.mxu0 0
    %871 = vmatpush2.bf16.msra.mxu0 0
    %872 = vmatprep.subr.bf16.mxu0 0
    %873 = vmatpush2.bf16.msra.mxu0 0
    %874 = vmatprep.subr.bf16.mxu0 0
    %875 = vmatpush2.bf16.msra.mxu0 0
    %876 = vmatprep.subr.bf16.mxu0 0
    %877 = vmatpush2.bf16.msra.mxu0 0
    %878 = vmatprep.mubr.bf16.mxu0 0
    %879 = vmatmul.mubr.bf16.gmra.mxu0 %v838
    %v880 = vpop.f32.mrf.mxu0
    %v881 = vadd.f32 0.0, %v880
    %v882 = vpop.f32.mrf.mxu0
    %v883 = vpop.f32.mrf.mxu0
    %v884 = vadd.f32 0.0, %v883
    %v885 = vpop.f32.mrf.mxu0
    %886 = vmatprep.mubr.bf16.mxu0 0
    %887 = vmatmul.mubr.bf16.gmra.mxu0 %v839
    %v888 = vpop.f32.mrf.mxu0
    %v889 = vadd.f32 0.0, %v888
    %v890 = vpop.f32.mrf.mxu0
    %v891 = vpop.f32.mrf.mxu0
    %v892 = vadd.f32 0.0, %v891
    %v893 = vpop.f32.mrf.mxu0
    %894 = vmatprep.mubr.bf16.mxu0 0
    %895 = vmatmul.mubr.bf16.gmra.mxu0 %v840
    %v896 = vpop.f32.mrf.mxu0
    %v897 = vadd.f32 0.0, %v896
    %v898 = vpop.f32.mrf.mxu0
    %v899 = vpop.f32.mrf.mxu0
    %v900 = vadd.f32 0.0, %v899
    %v901 = vpop.f32.mrf.mxu0
    %902 = vmatprep.mubr.bf16.mxu0 0
    %903 = vmatmul.mubr.bf16.gmra.mxu0 %v841
    %v904 = vpop.f32.mrf.mxu0
    %v905 = vadd.f32 0.0, %v904
    %v906 = vpop.f32.mrf.mxu0
    %v907 = vpop.f32.mrf.mxu0
    %v908 = vadd.f32 0.0, %v907
    %v909 = vpop.f32.mrf.mxu0
    %910 = vmatprep.mubr.bf16.mxu0 0
    %911 = vmatmul.mubr.bf16.gmra.mxu0 %v842
    %v912 = vpop.f32.mrf.mxu0
    %v913 = vadd.f32 0.0, %v912
    %v914 = vpop.f32.mrf.mxu0
    %v915 = vpop.f32.mrf.mxu0
    %v916 = vadd.f32 0.0, %v915
    %v917 = vpop.f32.mrf.mxu0
    %918 = vmatprep.mubr.bf16.mxu0 0
    %919 = vmatmul.mubr.bf16.gmra.mxu0 %v843
    %v920 = vpop.f32.mrf.mxu0
    %v921 = vadd.f32 0.0, %v920
    %v922 = vpop.f32.mrf.mxu0
    %v923 = vpop.f32.mrf.mxu0
    %v924 = vadd.f32 0.0, %v923
    %v925 = vpop.f32.mrf.mxu0
    %926 = vmatprep.mubr.bf16.mxu0 0
    %927 = vmatmul.mubr.bf16.gmra.mxu0 %v844
    %v928 = vpop.f32.mrf.mxu0
    %v929 = vadd.f32 0.0, %v928
    %v930 = vpop.f32.mrf.mxu0
    %v931 = vpop.f32.mrf.mxu0
    %v932 = vadd.f32 0.0, %v931
    %v933 = vpop.f32.mrf.mxu0
    %934 = vmatprep.mubr.bf16.mxu0 0
    %935 = vmatmul.mubr.bf16.gmra.mxu0 %v845
    %v936 = vpop.f32.mrf.mxu0
    %v937 = vadd.f32 0.0, %v936
    %v938 = vpop.f32.mrf.mxu0
    %v939 = vpop.f32.mrf.mxu0
    %v940 = vadd.f32 0.0, %v939
    %v941 = vpop.f32.mrf.mxu0
    %942 = vdwg.mxu0
    %v943 = vpack.c.bf16 %v884, %v881
    %v944 = vpack.c.bf16 %v892, %v889
    %v945 = vpack.c.bf16 %v900, %v897
    %v946 = vpack.c.bf16 %v908, %v905
    %v947 = vpack.c.bf16 %v916, %v913
    %v948 = vpack.c.bf16 %v924, %v921
    %v949 = vpack.c.bf16 %v932, %v929
    %v950 = vpack.c.bf16 %v940, %v937
    %951 = vset.pattern.permute.xlu0 4
    %952 = vperm.xlu0 %951, %v33
    %v953 = vpop.permute.xlu0 %952
    %954 = vset.pattern.permute.xlu0 4
    %955 = vperm.xlu0 %954, %v34
    %v956 = vpop.permute.xlu0 %955
    %957 = vset.pattern.permute.xlu0 4
    %958 = vperm.xlu0 %957, %v35
    %v959 = vpop.permute.xlu0 %958
    %960 = vset.pattern.permute.xlu0 4
    %961 = vperm.xlu0 %960, %v36
    %v962 = vpop.permute.xlu0 %961
    %963 = vset.pattern.permute.xlu0 4
    %964 = vperm.xlu0 %963, %v37
    %v965 = vpop.permute.xlu0 %964
    %966 = vset.pattern.permute.xlu0 4
    %967 = vperm.xlu0 %966, %v38
    %v968 = vpop.permute.xlu0 %967
    %969 = vset.pattern.permute.xlu0 4
    %970 = vperm.xlu0 %969, %v39
    %v971 = vpop.permute.xlu0 %970
    %972 = vset.pattern.permute.xlu0 4
    %973 = vperm.xlu0 %972, %v40
    %v974 = vpop.permute.xlu0 %973
    %975 = vset.pattern.permute.xlu0 4
    %976 = vperm.xlu0 %975, %v41
    %v977 = vpop.permute.xlu0 %976
    %978 = vset.pattern.permute.xlu0 4
    %979 = vperm.xlu0 %978, %v42
    %v980 = vpop.permute.xlu0 %979
    %981 = vset.pattern.permute.xlu0 4
    %982 = vperm.xlu0 %981, %v43
    %v983 = vpop.permute.xlu0 %982
    %984 = vset.pattern.permute.xlu0 4
    %985 = vperm.xlu0 %984, %v44
    %v986 = vpop.permute.xlu0 %985
    %987 = vset.pattern.permute.xlu0 4
    %988 = vperm.xlu0 %987, %v45
    %v989 = vpop.permute.xlu0 %988
    %990 = vset.pattern.permute.xlu0 4
    %991 = vperm.xlu0 %990, %v46
    %v992 = vpop.permute.xlu0 %991
    %993 = vset.pattern.permute.xlu0 4
    %994 = vperm.xlu0 %993, %v47
    %v995 = vpop.permute.xlu0 %994
    %996 = vset.pattern.permute.xlu0 4
    %997 = vperm.xlu0 %996, %v48
    %v998 = vpop.permute.xlu0 %997
    %vm999 = vcmp.eq.s32.totalorder %v66, %v953
    %vm1000 = vcmp.eq.s32.totalorder %v66, %v956
    %vm1001 = vcmp.eq.s32.totalorder %v66, %v959
    %vm1002 = vcmp.eq.s32.totalorder %v66, %v962
    %vm1003 = vcmp.eq.s32.totalorder %v66, %v965
    %vm1004 = vcmp.eq.s32.totalorder %v66, %v968
    %vm1005 = vcmp.eq.s32.totalorder %v66, %v971
    %vm1006 = vcmp.eq.s32.totalorder %v66, %v974
    %vm1007 = vcmp.eq.s32.totalorder %v66, %v977
    %vm1008 = vcmp.eq.s32.totalorder %v66, %v980
    %vm1009 = vcmp.eq.s32.totalorder %v66, %v983
    %vm1010 = vcmp.eq.s32.totalorder %v66, %v986
    %vm1011 = vcmp.eq.s32.totalorder %v66, %v989
    %vm1012 = vcmp.eq.s32.totalorder %v66, %v992
    %vm1013 = vcmp.eq.s32.totalorder %v66, %v995
    %vm1014 = vcmp.eq.s32.totalorder %v66, %v998
    %v1015 = vsel %vm999, 1, 0
    %v1016 = vsel %vm1000, 1, 0
    %v1017 = vsel %vm1001, 1, 0
    %v1018 = vsel %vm1002, 1, 0
    %v1019 = vsel %vm1003, 1, 0
    %v1020 = vsel %vm1004, 1, 0
    %v1021 = vsel %vm1005, 1, 0
    %v1022 = vsel %vm1006, 1, 0
    %v1023 = vsel %vm1007, 1, 0
    %v1024 = vsel %vm1008, 1, 0
    %v1025 = vsel %vm1009, 1, 0
    %v1026 = vsel %vm1010, 1, 0
    %v1027 = vsel %vm1011, 1, 0
    %v1028 = vsel %vm1012, 1, 0
    %v1029 = vsel %vm1013, 1, 0
    %v1030 = vsel %vm1014, 1, 0
    %v1031 = vcvt.s32.f32 %v1015
    %v1032 = vcvt.s32.f32 %v1016
    %v1033 = vcvt.s32.f32 %v1017
    %v1034 = vcvt.s32.f32 %v1018
    %v1035 = vcvt.s32.f32 %v1019
    %v1036 = vcvt.s32.f32 %v1020
    %v1037 = vcvt.s32.f32 %v1021
    %v1038 = vcvt.s32.f32 %v1022
    %v1039 = vcvt.s32.f32 %v1023
    %v1040 = vcvt.s32.f32 %v1024
    %v1041 = vcvt.s32.f32 %v1025
    %v1042 = vcvt.s32.f32 %v1026
    %v1043 = vcvt.s32.f32 %v1027
    %v1044 = vcvt.s32.f32 %v1028
    %v1045 = vcvt.s32.f32 %v1029
    %v1046 = vcvt.s32.f32 %v1030
    %v1047 = vpack.c.bf16 %v1032, %v1031
    %v1048 = vpack.c.bf16 %v1034, %v1033
    %v1049 = vpack.c.bf16 %v1036, %v1035
    %v1050 = vpack.c.bf16 %v1038, %v1037
    %v1051 = vpack.c.bf16 %v1040, %v1039
    %v1052 = vpack.c.bf16 %v1042, %v1041
    %v1053 = vpack.c.bf16 %v1044, %v1043
    %v1054 = vpack.c.bf16 %v1046, %v1045
    %1055 = vmatprep.subr.bf16.mxu0 0
    %1056 = vmatpush1.bf16.msra.mxu0 %v210
    %1057 = vmatprep.subr.bf16.mxu0 0
    %1058 = vmatpush1.bf16.msra.mxu0 %v209
    %1059 = vmatprep.subr.bf16.mxu0 0
    %1060 = vmatpush1.bf16.msra.mxu0 %v208
    %1061 = vmatprep.subr.bf16.mxu0 0
    %1062 = vmatpush1.bf16.msra.mxu0 %v207
    %1063 = vmatprep.subr.bf16.mxu0 0
    %1064 = vmatpush1.bf16.msra.mxu0 %v206
    %1065 = vmatprep.subr.bf16.mxu0 0
    %1066 = vmatpush1.bf16.msra.mxu0 %v205
    %1067 = vmatprep.subr.bf16.mxu0 0
    %1068 = vmatpush1.bf16.msra.mxu0 %v204
    %1069 = vmatprep.subr.bf16.mxu0 0
    %1070 = vmatpush1.bf16.msra.mxu0 %v203
    %1071 = vmatprep.subr.bf16.mxu0 0
    %1072 = vmatpush2.bf16.msra.mxu0 0
    %1073 = vmatprep.subr.bf16.mxu0 0
    %1074 = vmatpush2.bf16.msra.mxu0 0
    %1075 = vmatprep.subr.bf16.mxu0 0
    %1076 = vmatpush2.bf16.msra.mxu0 0
    %1077 = vmatprep.subr.bf16.mxu0 0
    %1078 = vmatpush2.bf16.msra.mxu0 0
    %1079 = vmatprep.subr.bf16.mxu0 0
    %1080 = vmatpush2.bf16.msra.mxu0 0
    %1081 = vmatprep.subr.bf16.mxu0 0
    %1082 = vmatpush2.bf16.msra.mxu0 0
    %1083 = vmatprep.subr.bf16.mxu0 0
    %1084 = vmatpush2.bf16.msra.mxu0 0
    %1085 = vmatprep.subr.bf16.mxu0 0
    %1086 = vmatpush2.bf16.msra.mxu0 0
    %1087 = vmatprep.mubr.bf16.mxu0 0
    %1088 = vmatmul.mubr.bf16.gmra.mxu0 %v1047
    %v1089 = vpop.f32.mrf.mxu0
    %v1090 = vadd.f32 0.0, %v1089
    %v1091 = vpop.f32.mrf.mxu0
    %v1092 = vpop.f32.mrf.mxu0
    %v1093 = vadd.f32 0.0, %v1092
    %v1094 = vpop.f32.mrf.mxu0
    %1095 = vmatprep.mubr.bf16.mxu0 0
    %1096 = vmatmul.mubr.bf16.gmra.mxu0 %v1048
    %v1097 = vpop.f32.mrf.mxu0
    %v1098 = vadd.f32 0.0, %v1097
    %v1099 = vpop.f32.mrf.mxu0
    %v1100 = vpop.f32.mrf.mxu0
    %v1101 = vadd.f32 0.0, %v1100
    %v1102 = vpop.f32.mrf.mxu0
    %1103 = vmatprep.mubr.bf16.mxu0 0
    %1104 = vmatmul.mubr.bf16.gmra.mxu0 %v1049
    %v1105 = vpop.f32.mrf.mxu0
    %v1106 = vadd.f32 0.0, %v1105
    %v1107 = vpop.f32.mrf.mxu0
    %v1108 = vpop.f32.mrf.mxu0
    %v1109 = vadd.f32 0.0, %v1108
    %v1110 = vpop.f32.mrf.mxu0
    %1111 = vmatprep.mubr.bf16.mxu0 0
    %1112 = vmatmul.mubr.bf16.gmra.mxu0 %v1050
    %v1113 = vpop.f32.mrf.mxu0
    %v1114 = vadd.f32 0.0, %v1113
    %v1115 = vpop.f32.mrf.mxu0
    %v1116 = vpop.f32.mrf.mxu0
    %v1117 = vadd.f32 0.0, %v1116
    %v1118 = vpop.f32.mrf.mxu0
    %1119 = vmatprep.mubr.bf16.mxu0 0
    %1120 = vmatmul.mubr.bf16.gmra.mxu0 %v1051
    %v1121 = vpop.f32.mrf.mxu0
    %v1122 = vadd.f32 0.0, %v1121
    %v1123 = vpop.f32.mrf.mxu0
    %v1124 = vpop.f32.mrf.mxu0
    %v1125 = vadd.f32 0.0, %v1124
    %v1126 = vpop.f32.mrf.mxu0
    %1127 = vmatprep.mubr.bf16.mxu0 0
    %1128 = vmatmul.mubr.bf16.gmra.mxu0 %v1052
    %v1129 = vpop.f32.mrf.mxu0
    %v1130 = vadd.f32 0.0, %v1129
    %v1131 = vpop.f32.mrf.mxu0
    %v1132 = vpop.f32.mrf.mxu0
    %v1133 = vadd.f32 0.0, %v1132
    %v1134 = vpop.f32.mrf.mxu0
    %1135 = vmatprep.mubr.bf16.mxu0 0
    %1136 = vmatmul.mubr.bf16.gmra.mxu0 %v1053
    %v1137 = vpop.f32.mrf.mxu0
    %v1138 = vadd.f32 0.0, %v1137
    %v1139 = vpop.f32.mrf.mxu0
    %v1140 = vpop.f32.mrf.mxu0
    %v1141 = vadd.f32 0.0, %v1140
    %v1142 = vpop.f32.mrf.mxu0
    %1143 = vmatprep.mubr.bf16.mxu0 0
    %1144 = vmatmul.mubr.bf16.gmra.mxu0 %v1054
    %v1145 = vpop.f32.mrf.mxu0
    %v1146 = vadd.f32 0.0, %v1145
    %v1147 = vpop.f32.mrf.mxu0
    %v1148 = vpop.f32.mrf.mxu0
    %v1149 = vadd.f32 0.0, %v1148
    %v1150 = vpop.f32.mrf.mxu0
    %1151 = vdwg.mxu0
    %v1152 = vpack.c.bf16 %v1093, %v1090
    %v1153 = vpack.c.bf16 %v1101, %v1098
    %v1154 = vpack.c.bf16 %v1109, %v1106
    %v1155 = vpack.c.bf16 %v1117, %v1114
    %v1156 = vpack.c.bf16 %v1125, %v1122
    %v1157 = vpack.c.bf16 %v1133, %v1130
    %v1158 = vpack.c.bf16 %v1141, %v1138
    %v1159 = vpack.c.bf16 %v1149, %v1146
    %v1160 = vld [vmem:[#allocation2] sm:$0xff]
    %v1161 = vld [vmem:[#allocation2 + $0x8] sm:$0xff]
    %v1162 = vld [vmem:[#allocation2 + $0x10] sm:$0xff]
    %v1163 = vld [vmem:[#allocation2 + $0x18] sm:$0xff]
    %v1164 = vld [vmem:[#allocation2 + $0x20] sm:$0xff]
    %v1165 = vld [vmem:[#allocation2 + $0x28] sm:$0xff]
    %v1166 = vld [vmem:[#allocation2 + $0x30] sm:$0xff]
    %v1167 = vld [vmem:[#allocation2 + $0x38] sm:$0xff]
    %v1168 = vld [vmem:[#allocation2 + $0x40] sm:$0xff]
    %v1169 = vld [vmem:[#allocation2 + $0x48] sm:$0xff]
    %v1170 = vld [vmem:[#allocation2 + $0x50] sm:$0xff]
    %v1171 = vld [vmem:[#allocation2 + $0x58] sm:$0xff]
    %v1172 = vld [vmem:[#allocation2 + $0x60] sm:$0xff]
    %v1173 = vld [vmem:[#allocation2 + $0x68] sm:$0xff]
    %v1174 = vld [vmem:[#allocation2 + $0x70] sm:$0xff]
    %v1175 = vld [vmem:[#allocation2 + $0x78] sm:$0xff]
    %v1176 = vld [vmem:[#allocation2 + $0x80] sm:$0xff]
    %v1177 = vld [vmem:[#allocation2 + $0x88] sm:$0xff]
    %v1178 = vld [vmem:[#allocation2 + $0x90] sm:$0xff]
    %v1179 = vld [vmem:[#allocation2 + $0x98] sm:$0xff]
    %v1180 = vld [vmem:[#allocation2 + $0xa0] sm:$0xff]
    %v1181 = vld [vmem:[#allocation2 + $0xa8] sm:$0xff]
    %v1182 = vld [vmem:[#allocation2 + $0xb0] sm:$0xff]
    %v1183 = vld [vmem:[#allocation2 + $0xb8] sm:$0xff]
    %v1184 = vld [vmem:[#allocation2 + $0xc0] sm:$0xff]
    %v1185 = vld [vmem:[#allocation2 + $0xc8] sm:$0xff]
    %v1186 = vld [vmem:[#allocation2 + $0xd0] sm:$0xff]
    %v1187 = vld [vmem:[#allocation2 + $0xd8] sm:$0xff]
    %v1188 = vld [vmem:[#allocation2 + $0xe0] sm:$0xff]
    %v1189 = vld [vmem:[#allocation2 + $0xe8] sm:$0xff]
    %v1190 = vld [vmem:[#allocation2 + $0xf0] sm:$0xff]
    %v1191 = vld [vmem:[#allocation2 + $0xf8] sm:$0xff]
    %v1192 = vld [vmem:[#allocation2 + $0x100] sm:$0xff]
    %v1193 = vld [vmem:[#allocation2 + $0x108] sm:$0xff]
    %v1194 = vld [vmem:[#allocation2 + $0x110] sm:$0xff]
    %v1195 = vld [vmem:[#allocation2 + $0x118] sm:$0xff]
    %v1196 = vld [vmem:[#allocation2 + $0x120] sm:$0xff]
    %v1197 = vld [vmem:[#allocation2 + $0x128] sm:$0xff]
    %v1198 = vld [vmem:[#allocation2 + $0x130] sm:$0xff]
    %v1199 = vld [vmem:[#allocation2 + $0x138] sm:$0xff]
    %v1200 = vld [vmem:[#allocation2 + $0x140] sm:$0xff]
    %v1201 = vld [vmem:[#allocation2 + $0x148] sm:$0xff]
    %v1202 = vld [vmem:[#allocation2 + $0x150] sm:$0xff]
    %v1203 = vld [vmem:[#allocation2 + $0x158] sm:$0xff]
    %v1204 = vld [vmem:[#allocation2 + $0x160] sm:$0xff]
    %v1205 = vld [vmem:[#allocation2 + $0x168] sm:$0xff]
    %v1206 = vld [vmem:[#allocation2 + $0x170] sm:$0xff]
    %v1207 = vld [vmem:[#allocation2 + $0x178] sm:$0xff]
    %v1208 = vld [vmem:[#allocation2 + $0x180] sm:$0xff]
    %v1209 = vld [vmem:[#allocation2 + $0x188] sm:$0xff]
    %v1210 = vld [vmem:[#allocation2 + $0x190] sm:$0xff]
    %v1211 = vld [vmem:[#allocation2 + $0x198] sm:$0xff]
    %v1212 = vld [vmem:[#allocation2 + $0x1a0] sm:$0xff]
    %v1213 = vld [vmem:[#allocation2 + $0x1a8] sm:$0xff]
    %v1214 = vld [vmem:[#allocation2 + $0x1b0] sm:$0xff]
    %v1215 = vld [vmem:[#allocation2 + $0x1b8] sm:$0xff]
    %v1216 = vld [vmem:[#allocation2 + $0x1c0] sm:$0xff]
    %v1217 = vld [vmem:[#allocation2 + $0x1c8] sm:$0xff]
    %v1218 = vld [vmem:[#allocation2 + $0x1d0] sm:$0xff]
    %v1219 = vld [vmem:[#allocation2 + $0x1d8] sm:$0xff]
    %v1220 = vld [vmem:[#allocation2 + $0x1e0] sm:$0xff]
    %v1221 = vld [vmem:[#allocation2 + $0x1e8] sm:$0xff]
    %v1222 = vld [vmem:[#allocation2 + $0x1f0] sm:$0xff]
    %v1223 = vld [vmem:[#allocation2 + $0x1f8] sm:$0xff]
    %v1224 = vld [vmem:[#allocation2 + $0x200] sm:$0xff]
    %v1225 = vld [vmem:[#allocation2 + $0x208] sm:$0xff]
    %v1226 = vld [vmem:[#allocation2 + $0x210] sm:$0xff]
    %v1227 = vld [vmem:[#allocation2 + $0x218] sm:$0xff]
    %v1228 = vld [vmem:[#allocation2 + $0x220] sm:$0xff]
    %v1229 = vld [vmem:[#allocation2 + $0x228] sm:$0xff]
    %v1230 = vld [vmem:[#allocation2 + $0x230] sm:$0xff]
    %v1231 = vld [vmem:[#allocation2 + $0x238] sm:$0xff]
    %v1232 = vld [vmem:[#allocation2 + $0x240] sm:$0xff]
    %v1233 = vld [vmem:[#allocation2 + $0x248] sm:$0xff]
    %v1234 = vld [vmem:[#allocation2 + $0x250] sm:$0xff]
    %v1235 = vld [vmem:[#allocation2 + $0x258] sm:$0xff]
    %v1236 = vld [vmem:[#allocation2 + $0x260] sm:$0xff]
    %v1237 = vld [vmem:[#allocation2 + $0x268] sm:$0xff]
    %v1238 = vld [vmem:[#allocation2 + $0x270] sm:$0xff]
    %v1239 = vld [vmem:[#allocation2 + $0x278] sm:$0xff]
    %v1240 = vld [vmem:[%s3] sm:$0x3]
    %v1242 = vlaneseq
    %v1243 = vshrl.u32 %v1242, 7
    %v1244 = vsub.s32 0, %v1243
    %v1245 = vrot.slane %v1240, %v1244
    %v1246 = vlaneseq
    %v1247 = vshrl.u32 %v1246, 7
    %v1248 = vsub.s32 1, %v1247
    %v1249 = vrot.slane %v1240, %v1248
    %v1332 = vunpack.c.l.b16 %v1160
    %v1333 = vunpack.c.h.b16 %v1160
    %v1334 = vunpack.c.l.b16 %v1161
    %v1335 = vunpack.c.h.b16 %v1161
    %v1336 = vunpack.c.l.b16 %v1162
    %v1337 = vunpack.c.h.b16 %v1162
    %v1338 = vunpack.c.l.b16 %v1163
    %v1339 = vunpack.c.h.b16 %v1163
    %v1340 = vunpack.c.l.b16 %v1164
    %v1341 = vunpack.c.h.b16 %v1164
    %v1342 = vunpack.c.l.b16 %v1165
    %v1343 = vunpack.c.h.b16 %v1165
    %v1344 = vunpack.c.l.b16 %v1166
    %v1345 = vunpack.c.h.b16 %v1166
    %v1346 = vunpack.c.l.b16 %v1167
    %v1347 = vunpack.c.h.b16 %v1167
    %v1348 = vunpack.c.l.b16 %v1168
    %v1349 = vunpack.c.h.b16 %v1168
    %v1350 = vunpack.c.l.b16 %v1169
    %v1351 = vunpack.c.h.b16 %v1169
    %v1352 = vunpack.c.l.b16 %v1170
    %v1353 = vunpack.c.h.b16 %v1170
    %v1354 = vunpack.c.l.b16 %v1171
    %v1355 = vunpack.c.h.b16 %v1171
    %v1356 = vunpack.c.l.b16 %v1172
    %v1357 = vunpack.c.h.b16 %v1172
    %v1358 = vunpack.c.l.b16 %v1173
    %v1359 = vunpack.c.h.b16 %v1173
    %v1360 = vunpack.c.l.b16 %v1174
    %v1361 = vunpack.c.h.b16 %v1174
    %v1362 = vunpack.c.l.b16 %v1175
    %v1363 = vunpack.c.h.b16 %v1175
    %v1364 = vunpack.c.l.b16 %v1176
    %v1365 = vunpack.c.h.b16 %v1176
    %v1366 = vunpack.c.l.b16 %v1177
    %v1367 = vunpack.c.h.b16 %v1177
    %v1368 = vunpack.c.l.b16 %v1178
    %v1369 = vunpack.c.h.b16 %v1178
    %v1370 = vunpack.c.l.b16 %v1179
    %v1371 = vunpack.c.h.b16 %v1179
    %v1372 = vunpack.c.l.b16 %v1180
    %v1373 = vunpack.c.h.b16 %v1180
    %v1374 = vunpack.c.l.b16 %v1181
    %v1375 = vunpack.c.h.b16 %v1181
    %v1376 = vunpack.c.l.b16 %v1182
    %v1377 = vunpack.c.h.b16 %v1182
    %v1378 = vunpack.c.l.b16 %v1183
    %v1379 = vunpack.c.h.b16 %v1183
    %v1380 = vunpack.c.l.b16 %v1184
    %v1381 = vunpack.c.h.b16 %v1184
    %v1382 = vunpack.c.l.b16 %v1185
    %v1383 = vunpack.c.h.b16 %v1185
    %v1384 = vunpack.c.l.b16 %v1186
    %v1385 = vunpack.c.h.b16 %v1186
    %v1386 = vunpack.c.l.b16 %v1187
    %v1387 = vunpack.c.h.b16 %v1187
    %v1388 = vunpack.c.l.b16 %v1188
    %v1389 = vunpack.c.h.b16 %v1188
    %v1390 = vunpack.c.l.b16 %v1189
    %v1391 = vunpack.c.h.b16 %v1189
    %v1392 = vunpack.c.l.b16 %v1190
    %v1393 = vunpack.c.h.b16 %v1190
    %v1394 = vunpack.c.l.b16 %v1191
    %v1395 = vunpack.c.h.b16 %v1191
    %v1396 = vunpack.c.l.b16 %v1192
    %v1397 = vunpack.c.h.b16 %v1192
    %v1398 = vunpack.c.l.b16 %v1193
    %v1399 = vunpack.c.h.b16 %v1193
    %v1400 = vunpack.c.l.b16 %v1194
    %v1401 = vunpack.c.h.b16 %v1194
    %v1402 = vunpack.c.l.b16 %v1195
    %v1403 = vunpack.c.h.b16 %v1195
    %v1404 = vunpack.c.l.b16 %v1196
    %v1405 = vunpack.c.h.b16 %v1196
    %v1406 = vunpack.c.l.b16 %v1197
    %v1407 = vunpack.c.h.b16 %v1197
    %v1408 = vunpack.c.l.b16 %v1198
    %v1409 = vunpack.c.h.b16 %v1198
    %v1410 = vunpack.c.l.b16 %v1199
    %v1411 = vunpack.c.h.b16 %v1199
    %v1412 = vunpack.c.l.b16 %v1200
    %v1413 = vunpack.c.h.b16 %v1200
    %v1414 = vunpack.c.l.b16 %v1201
    %v1415 = vunpack.c.h.b16 %v1201
    %v1416 = vunpack.c.l.b16 %v1202
    %v1417 = vunpack.c.h.b16 %v1202
    %v1418 = vunpack.c.l.b16 %v1203
    %v1419 = vunpack.c.h.b16 %v1203
    %v1420 = vunpack.c.l.b16 %v1204
    %v1421 = vunpack.c.h.b16 %v1204
    %v1422 = vunpack.c.l.b16 %v1205
    %v1423 = vunpack.c.h.b16 %v1205
    %v1424 = vunpack.c.l.b16 %v1206
    %v1425 = vunpack.c.h.b16 %v1206
    %v1426 = vunpack.c.l.b16 %v1207
    %v1427 = vunpack.c.h.b16 %v1207
    %v1428 = vunpack.c.l.b16 %v1208
    %v1429 = vunpack.c.h.b16 %v1208
    %v1430 = vunpack.c.l.b16 %v1209
    %v1431 = vunpack.c.h.b16 %v1209
    %v1432 = vunpack.c.l.b16 %v1210
    %v1433 = vunpack.c.h.b16 %v1210
    %v1434 = vunpack.c.l.b16 %v1211
    %v1435 = vunpack.c.h.b16 %v1211
    %v1436 = vunpack.c.l.b16 %v1212
    %v1437 = vunpack.c.h.b16 %v1212
    %v1438 = vunpack.c.l.b16 %v1213
    %v1439 = vunpack.c.h.b16 %v1213
    %v1440 = vunpack.c.l.b16 %v1214
    %v1441 = vunpack.c.h.b16 %v1214
    %v1442 = vunpack.c.l.b16 %v1215
    %v1443 = vunpack.c.h.b16 %v1215
    %v1444 = vunpack.c.l.b16 %v1216
    %v1445 = vunpack.c.h.b16 %v1216
    %v1446 = vunpack.c.l.b16 %v1217
    %v1447 = vunpack.c.h.b16 %v1217
    %v1448 = vunpack.c.l.b16 %v1218
    %v1449 = vunpack.c.h.b16 %v1218
    %v1450 = vunpack.c.l.b16 %v1219
    %v1451 = vunpack.c.h.b16 %v1219
    %v1452 = vunpack.c.l.b16 %v1220
    %v1453 = vunpack.c.h.b16 %v1220
    %v1454 = vunpack.c.l.b16 %v1221
    %v1455 = vunpack.c.h.b16 %v1221
    %v1456 = vunpack.c.l.b16 %v1222
    %v1457 = vunpack.c.h.b16 %v1222
    %v1458 = vunpack.c.l.b16 %v1223
    %v1459 = vunpack.c.h.b16 %v1223
    %v1460 = vunpack.c.l.b16 %v1224
    %v1461 = vunpack.c.h.b16 %v1224
    %v1462 = vunpack.c.l.b16 %v1225
    %v1463 = vunpack.c.h.b16 %v1225
    %v1464 = vunpack.c.l.b16 %v1226
    %v1465 = vunpack.c.h.b16 %v1226
    %v1466 = vunpack.c.l.b16 %v1227
    %v1467 = vunpack.c.h.b16 %v1227
    %v1468 = vunpack.c.l.b16 %v1228
    %v1469 = vunpack.c.h.b16 %v1228
    %v1470 = vunpack.c.l.b16 %v1229
    %v1471 = vunpack.c.h.b16 %v1229
    %v1472 = vunpack.c.l.b16 %v1230
    %v1473 = vunpack.c.h.b16 %v1230
    %v1474 = vunpack.c.l.b16 %v1231
    %v1475 = vunpack.c.h.b16 %v1231
    %v1476 = vunpack.c.l.b16 %v1232
    %v1477 = vunpack.c.h.b16 %v1232
    %v1478 = vunpack.c.l.b16 %v1233
    %v1479 = vunpack.c.h.b16 %v1233
    %v1480 = vunpack.c.l.b16 %v1234
    %v1481 = vunpack.c.h.b16 %v1234
    %v1482 = vunpack.c.l.b16 %v1235
    %v1483 = vunpack.c.h.b16 %v1235
    %v1484 = vunpack.c.l.b16 %v1236
    %v1485 = vunpack.c.h.b16 %v1236
    %v1486 = vunpack.c.l.b16 %v1237
    %v1487 = vunpack.c.h.b16 %v1237
    %v1488 = vunpack.c.l.b16 %v1238
    %v1489 = vunpack.c.h.b16 %v1238
    %v1490 = vunpack.c.l.b16 %v1239
    %v1491 = vunpack.c.h.b16 %v1239
    %v1492 = vpack.c.b16 %v1334, %v1332
    %v1493 = vpack.c.b16 %v1335, %v1333
    %v1494 = vpack.c.b16 %v1338, %v1336
    %v1495 = vpack.c.b16 %v1339, %v1337
    %v1496 = vpack.c.b16 %v1342, %v1340
    %v1497 = vpack.c.b16 %v1343, %v1341
    %v1498 = vpack.c.b16 %v1346, %v1344
    %v1499 = vpack.c.b16 %v1347, %v1345
    %v1500 = vpack.c.b16 %v1350, %v1348
    %v1501 = vpack.c.b16 %v1351, %v1349
    %v1502 = vpack.c.b16 %v1354, %v1352
    %v1503 = vpack.c.b16 %v1355, %v1353
    %v1504 = vpack.c.b16 %v1358, %v1356
    %v1505 = vpack.c.b16 %v1359, %v1357
    %v1506 = vpack.c.b16 %v1362, %v1360
    %v1507 = vpack.c.b16 %v1363, %v1361
    %v1508 = vpack.c.b16 %v1366, %v1364
    %v1509 = vpack.c.b16 %v1367, %v1365
    %v1510 = vpack.c.b16 %v1370, %v1368
    %v1511 = vpack.c.b16 %v1371, %v1369
    %v1512 = vpack.c.b16 %v1374, %v1372
    %v1513 = vpack.c.b16 %v1375, %v1373
    %v1514 = vpack.c.b16 %v1378, %v1376
    %v1515 = vpack.c.b16 %v1379, %v1377
    %v1516 = vpack.c.b16 %v1382, %v1380
    %v1517 = vpack.c.b16 %v1383, %v1381
    %v1518 = vpack.c.b16 %v1386, %v1384
    %v1519 = vpack.c.b16 %v1387, %v1385
    %v1520 = vpack.c.b16 %v1390, %v1388
    %v1521 = vpack.c.b16 %v1391, %v1389
    %v1522 = vpack.c.b16 %v1394, %v1392
    %v1523 = vpack.c.b16 %v1395, %v1393
    %v1524 = vpack.c.b16 %v1398, %v1396
    %v1525 = vpack.c.b16 %v1399, %v1397
    %v1526 = vpack.c.b16 %v1402, %v1400
    %v1527 = vpack.c.b16 %v1403, %v1401
    %v1528 = vpack.c.b16 %v1406, %v1404
    %v1529 = vpack.c.b16 %v1407, %v1405
    %v1530 = vpack.c.b16 %v1410, %v1408
    %v1531 = vpack.c.b16 %v1411, %v1409
    %v1532 = vpack.c.b16 %v1414, %v1412
    %v1533 = vpack.c.b16 %v1415, %v1413
    %v1534 = vpack.c.b16 %v1418, %v1416
    %v1535 = vpack.c.b16 %v1419, %v1417
    %v1536 = vpack.c.b16 %v1422, %v1420
    %v1537 = vpack.c.b16 %v1423, %v1421
    %v1538 = vpack.c.b16 %v1426, %v1424
    %v1539 = vpack.c.b16 %v1427, %v1425
    %v1540 = vpack.c.b16 %v1430, %v1428
    %v1541 = vpack.c.b16 %v1431, %v1429
    %v1542 = vpack.c.b16 %v1434, %v1432
    %v1543 = vpack.c.b16 %v1435, %v1433
    %v1544 = vpack.c.b16 %v1438, %v1436
    %v1545 = vpack.c.b16 %v1439, %v1437
    %v1546 = vpack.c.b16 %v1442, %v1440
    %v1547 = vpack.c.b16 %v1443, %v1441
    %v1548 = vpack.c.b16 %v1446, %v1444
    %v1549 = vpack.c.b16 %v1447, %v1445
    %v1550 = vpack.c.b16 %v1450, %v1448
    %v1551 = vpack.c.b16 %v1451, %v1449
    %v1552 = vpack.c.b16 %v1454, %v1452
    %v1553 = vpack.c.b16 %v1455, %v1453
    %v1554 = vpack.c.b16 %v1458, %v1456
    %v1555 = vpack.c.b16 %v1459, %v1457
    %v1556 = vpack.c.b16 %v1462, %v1460
    %v1557 = vpack.c.b16 %v1463, %v1461
    %v1558 = vpack.c.b16 %v1466, %v1464
    %v1559 = vpack.c.b16 %v1467, %v1465
    %v1560 = vpack.c.b16 %v1470, %v1468
    %v1561 = vpack.c.b16 %v1471, %v1469
    %v1562 = vpack.c.b16 %v1474, %v1472
    %v1563 = vpack.c.b16 %v1475, %v1473
    %v1564 = vpack.c.b16 %v1478, %v1476
    %v1565 = vpack.c.b16 %v1479, %v1477
    %v1566 = vpack.c.b16 %v1482, %v1480
    %v1567 = vpack.c.b16 %v1483, %v1481
    %v1568 = vpack.c.b16 %v1486, %v1484
    %v1569 = vpack.c.b16 %v1487, %v1485
    %v1570 = vpack.c.b16 %v1490, %v1488
    %v1571 = vpack.c.b16 %v1491, %v1489
    %1652 = vmatprep.subr.bf16.mxu0 %v1507
    %1653 = vmatpush1.bf16.msra.mxu0 %v1506
    %1654 = vmatprep.subr.bf16.mxu0 %v1505
    %1655 = vmatpush1.bf16.msra.mxu0 %v1504
    %1656 = vmatprep.subr.bf16.mxu0 %v1503
    %1657 = vmatpush1.bf16.msra.mxu0 %v1502
    %1658 = vmatprep.subr.bf16.mxu0 %v1501
    %1659 = vmatpush1.bf16.msra.mxu0 %v1500
    %1660 = vmatprep.subr.bf16.mxu0 %v1499
    %1661 = vmatpush1.bf16.msra.mxu0 %v1498
    %1662 = vmatprep.subr.bf16.mxu0 %v1497
    %1663 = vmatpush1.bf16.msra.mxu0 %v1496
    %1664 = vmatprep.subr.bf16.mxu0 %v1495
    %1665 = vmatpush1.bf16.msra.mxu0 %v1494
    %1666 = vmatprep.subr.bf16.mxu0 %v1493
    %1667 = vmatpush1.bf16.msra.mxu0 %v1492
    %1668 = vmatprep.subr.bf16.mxu0 %v1523
    %1669 = vmatpush2.bf16.msra.mxu0 %v1522
    %1670 = vmatprep.subr.bf16.mxu0 %v1521
    %1671 = vmatpush2.bf16.msra.mxu0 %v1520
    %1672 = vmatprep.subr.bf16.mxu0 %v1519
    %1673 = vmatpush2.bf16.msra.mxu0 %v1518
    %1674 = vmatprep.subr.bf16.mxu0 %v1517
    %1675 = vmatpush2.bf16.msra.mxu0 %v1516
    %1676 = vmatprep.subr.bf16.mxu0 %v1515
    %1677 = vmatpush2.bf16.msra.mxu0 %v1514
    %1678 = vmatprep.subr.bf16.mxu0 %v1513
    %1679 = vmatpush2.bf16.msra.mxu0 %v1512
    %1680 = vmatprep.subr.bf16.mxu0 %v1511
    %1681 = vmatpush2.bf16.msra.mxu0 %v1510
    %1682 = vmatprep.subr.bf16.mxu0 %v1509
    %1683 = vmatpush2.bf16.msra.mxu0 %v1508
    %1684 = vmatprep.mubr.bf16.mxu0 %v525
    %1685 = vmatmul.mubr.bf16.gmra.mxu0 %v316
    %v1686 = vpop.f32.mrf.mxu0
    %v1687 = vadd.f32 %v1245, %v1686
    %v1688 = vpop.f32.mrf.mxu0
    %v1689 = vadd.f32 %v1249, %v1688
    %v1690 = vpop.f32.mrf.mxu0
    %v1691 = vadd.f32 %v1245, %v1690
    %v1692 = vpop.f32.mrf.mxu0
    %v1693 = vadd.f32 %v1249, %v1692
    %1694 = vmatprep.mubr.bf16.mxu0 %v526
    %1695 = vmatmul.mubr.bf16.gmra.mxu0 %v317
    %v1696 = vpop.f32.mrf.mxu0
    %v1697 = vadd.f32 %v1245, %v1696
    %v1698 = vpop.f32.mrf.mxu0
    %v1699 = vadd.f32 %v1249, %v1698
    %v1700 = vpop.f32.mrf.mxu0
    %v1701 = vadd.f32 %v1245, %v1700
    %v1702 = vpop.f32.mrf.mxu0
    %v1703 = vadd.f32 %v1249, %v1702
    %1704 = vmatprep.mubr.bf16.mxu0 %v527
    %1705 = vmatmul.mubr.bf16.gmra.mxu0 %v318
    %v1706 = vpop.f32.mrf.mxu0
    %v1707 = vadd.f32 %v1245, %v1706
    %v1708 = vpop.f32.mrf.mxu0
    %v1709 = vadd.f32 %v1249, %v1708
    %v1710 = vpop.f32.mrf.mxu0
    %v1711 = vadd.f32 %v1245, %v1710
    %v1712 = vpop.f32.mrf.mxu0
    %v1713 = vadd.f32 %v1249, %v1712
    %1714 = vmatprep.mubr.bf16.mxu0 %v528
    %1715 = vmatmul.mubr.bf16.gmra.mxu0 %v319
    %v1716 = vpop.f32.mrf.mxu0
    %v1717 = vadd.f32 %v1245, %v1716
    %v1718 = vpop.f32.mrf.mxu0
    %v1719 = vadd.f32 %v1249, %v1718
    %v1720 = vpop.f32.mrf.mxu0
    %v1721 = vadd.f32 %v1245, %v1720
    %v1722 = vpop.f32.mrf.mxu0
    %v1723 = vadd.f32 %v1249, %v1722
    %1724 = vmatprep.mubr.bf16.mxu0 %v529
    %1725 = vmatmul.mubr.bf16.gmra.mxu0 %v320
    %v1726 = vpop.f32.mrf.mxu0
    %v1727 = vadd.f32 %v1245, %v1726
    %v1728 = vpop.f32.mrf.mxu0
    %v1729 = vadd.f32 %v1249, %v1728
    %v1730 = vpop.f32.mrf.mxu0
    %v1731 = vadd.f32 %v1245, %v1730
    %v1732 = vpop.f32.mrf.mxu0
    %v1733 = vadd.f32 %v1249, %v1732
    %1734 = vmatprep.mubr.bf16.mxu0 %v530
    %1735 = vmatmul.mubr.bf16.gmra.mxu0 %v321
    %v1736 = vpop.f32.mrf.mxu0
    %v1737 = vadd.f32 %v1245, %v1736
    %v1738 = vpop.f32.mrf.mxu0
    %v1739 = vadd.f32 %v1249, %v1738
    %v1740 = vpop.f32.mrf.mxu0
    %v1741 = vadd.f32 %v1245, %v1740
    %v1742 = vpop.f32.mrf.mxu0
    %v1743 = vadd.f32 %v1249, %v1742
    %1744 = vmatprep.mubr.bf16.mxu0 %v531
    %1745 = vmatmul.mubr.bf16.gmra.mxu0 %v322
    %v1746 = vpop.f32.mrf.mxu0
    %v1747 = vadd.f32 %v1245, %v1746
    %v1748 = vpop.f32.mrf.mxu0
    %v1749 = vadd.f32 %v1249, %v1748
    %v1750 = vpop.f32.mrf.mxu0
    %v1751 = vadd.f32 %v1245, %v1750
    %v1752 = vpop.f32.mrf.mxu0
    %v1753 = vadd.f32 %v1249, %v1752
    %1754 = vmatprep.mubr.bf16.mxu0 %v532
    %1755 = vmatmul.mubr.bf16.gmra.mxu0 %v323
    %v1756 = vpop.f32.mrf.mxu0
    %v1757 = vadd.f32 %v1245, %v1756
    %v1758 = vpop.f32.mrf.mxu0
    %v1759 = vadd.f32 %v1249, %v1758
    %v1760 = vpop.f32.mrf.mxu0
    %v1761 = vadd.f32 %v1245, %v1760
    %v1762 = vpop.f32.mrf.mxu0
    %v1763 = vadd.f32 %v1249, %v1762
    %1764 = vdwg.mxu0
    %1765 = vmatprep.subr.bf16.mxu0 %v1539
    %1766 = vmatpush1.bf16.msra.mxu0 %v1538
    %1767 = vmatprep.subr.bf16.mxu0 %v1537
    %1768 = vmatpush1.bf16.msra.mxu0 %v1536
    %1769 = vmatprep.subr.bf16.mxu0 %v1535
    %1770 = vmatpush1.bf16.msra.mxu0 %v1534
    %1771 = vmatprep.subr.bf16.mxu0 %v1533
    %1772 = vmatpush1.bf16.msra.mxu0 %v1532
    %1773 = vmatprep.subr.bf16.mxu0 %v1531
    %1774 = vmatpush1.bf16.msra.mxu0 %v1530
    %1775 = vmatprep.subr.bf16.mxu0 %v1529
    %1776 = vmatpush1.bf16.msra.mxu0 %v1528
    %1777 = vmatprep.subr.bf16.mxu0 %v1527
    %1778 = vmatpush1.bf16.msra.mxu0 %v1526
    %1779 = vmatprep.subr.bf16.mxu0 %v1525
    %1780 = vmatpush1.bf16.msra.mxu0 %v1524
    %1781 = vmatprep.subr.bf16.mxu0 %v1555
    %1782 = vmatpush2.bf16.msra.mxu0 %v1554
    %1783 = vmatprep.subr.bf16.mxu0 %v1553
    %1784 = vmatpush2.bf16.msra.mxu0 %v1552
    %1785 = vmatprep.subr.bf16.mxu0 %v1551
    %1786 = vmatpush2.bf16.msra.mxu0 %v1550
    %1787 = vmatprep.subr.bf16.mxu0 %v1549
    %1788 = vmatpush2.bf16.msra.mxu0 %v1548
    %1789 = vmatprep.subr.bf16.mxu0 %v1547
    %1790 = vmatpush2.bf16.msra.mxu0 %v1546
    %1791 = vmatprep.subr.bf16.mxu0 %v1545
    %1792 = vmatpush2.bf16.msra.mxu0 %v1544
    %1793 = vmatprep.subr.bf16.mxu0 %v1543
    %1794 = vmatpush2.bf16.msra.mxu0 %v1542
    %1795 = vmatprep.subr.bf16.mxu0 %v1541
    %1796 = vmatpush2.bf16.msra.mxu0 %v1540
    %1797 = vmatprep.mubr.bf16.mxu0 %v943
    %1798 = vmatmul.mubr.bf16.gmra.mxu0 %v734
    %v1799 = vpop.f32.mrf.mxu0
    %v1800 = vadd.f32 %v1687, %v1799
    %v1801 = vpop.f32.mrf.mxu0
    %v1802 = vadd.f32 %v1689, %v1801
    %v1803 = vpop.f32.mrf.mxu0
    %v1804 = vadd.f32 %v1691, %v1803
    %v1805 = vpop.f32.mrf.mxu0
    %v1806 = vadd.f32 %v1693, %v1805
    %1807 = vmatprep.mubr.bf16.mxu0 %v944
    %1808 = vmatmul.mubr.bf16.gmra.mxu0 %v735
    %v1809 = vpop.f32.mrf.mxu0
    %v1810 = vadd.f32 %v1697, %v1809
    %v1811 = vpop.f32.mrf.mxu0
    %v1812 = vadd.f32 %v1699, %v1811
    %v1813 = vpop.f32.mrf.mxu0
    %v1814 = vadd.f32 %v1701, %v1813
    %v1815 = vpop.f32.mrf.mxu0
    %v1816 = vadd.f32 %v1703, %v1815
    %1817 = vmatprep.mubr.bf16.mxu0 %v945
    %1818 = vmatmul.mubr.bf16.gmra.mxu0 %v736
    %v1819 = vpop.f32.mrf.mxu0
    %v1820 = vadd.f32 %v1707, %v1819
    %v1821 = vpop.f32.mrf.mxu0
    %v1822 = vadd.f32 %v1709, %v1821
    %v1823 = vpop.f32.mrf.mxu0
    %v1824 = vadd.f32 %v1711, %v1823
    %v1825 = vpop.f32.mrf.mxu0
    %v1826 = vadd.f32 %v1713, %v1825
    %1827 = vmatprep.mubr.bf16.mxu0 %v946
    %1828 = vmatmul.mubr.bf16.gmra.mxu0 %v737
    %v1829 = vpop.f32.mrf.mxu0
    %v1830 = vadd.f32 %v1717, %v1829
    %v1831 = vpop.f32.mrf.mxu0
    %v1832 = vadd.f32 %v1719, %v1831
    %v1833 = vpop.f32.mrf.mxu0
    %v1834 = vadd.f32 %v1721, %v1833
    %v1835 = vpop.f32.mrf.mxu0
    %v1836 = vadd.f32 %v1723, %v1835
    %1837 = vmatprep.mubr.bf16.mxu0 %v947
    %1838 = vmatmul.mubr.bf16.gmra.mxu0 %v738
    %v1839 = vpop.f32.mrf.mxu0
    %v1840 = vadd.f32 %v1727, %v1839
    %v1841 = vpop.f32.mrf.mxu0
    %v1842 = vadd.f32 %v1729, %v1841
    %v1843 = vpop.f32.mrf.mxu0
    %v1844 = vadd.f32 %v1731, %v1843
    %v1845 = vpop.f32.mrf.mxu0
    %v1846 = vadd.f32 %v1733, %v1845
    %1847 = vmatprep.mubr.bf16.mxu0 %v948
    %1848 = vmatmul.mubr.bf16.gmra.mxu0 %v739
    %v1849 = vpop.f32.mrf.mxu0
    %v1850 = vadd.f32 %v1737, %v1849
    %v1851 = vpop.f32.mrf.mxu0
    %v1852 = vadd.f32 %v1739, %v1851
    %v1853 = vpop.f32.mrf.mxu0
    %v1854 = vadd.f32 %v1741, %v1853
    %v1855 = vpop.f32.mrf.mxu0
    %v1856 = vadd.f32 %v1743, %v1855
    %1857 = vmatprep.mubr.bf16.mxu0 %v949
    %1858 = vmatmul.mubr.bf16.gmra.mxu0 %v740
    %v1859 = vpop.f32.mrf.mxu0
    %v1860 = vadd.f32 %v1747, %v1859
    %v1861 = vpop.f32.mrf.mxu0
    %v1862 = vadd.f32 %v1749, %v1861
    %v1863 = vpop.f32.mrf.mxu0
    %v1864 = vadd.f32 %v1751, %v1863
    %v1865 = vpop.f32.mrf.mxu0
    %v1866 = vadd.f32 %v1753, %v1865
    %1867 = vmatprep.mubr.bf16.mxu0 %v950
    %1868 = vmatmul.mubr.bf16.gmra.mxu0 %v741
    %v1869 = vpop.f32.mrf.mxu0
    %v1870 = vadd.f32 %v1757, %v1869
    %v1871 = vpop.f32.mrf.mxu0
    %v1872 = vadd.f32 %v1759, %v1871
    %v1873 = vpop.f32.mrf.mxu0
    %v1874 = vadd.f32 %v1761, %v1873
    %v1875 = vpop.f32.mrf.mxu0
    %v1876 = vadd.f32 %v1763, %v1875
    %1877 = vdwg.mxu0
    %1878 = vmatprep.subr.bf16.mxu0 %v1571
    %1879 = vmatpush1.bf16.msra.mxu0 %v1570
    %1880 = vmatprep.subr.bf16.mxu0 %v1569
    %1881 = vmatpush1.bf16.msra.mxu0 %v1568
    %1882 = vmatprep.subr.bf16.mxu0 %v1567
    %1883 = vmatpush1.bf16.msra.mxu0 %v1566
    %1884 = vmatprep.subr.bf16.mxu0 %v1565
    %1885 = vmatpush1.bf16.msra.mxu0 %v1564
    %1886 = vmatprep.subr.bf16.mxu0 %v1563
    %1887 = vmatpush1.bf16.msra.mxu0 %v1562
    %1888 = vmatprep.subr.bf16.mxu0 %v1561
    %1889 = vmatpush1.bf16.msra.mxu0 %v1560
    %1890 = vmatprep.subr.bf16.mxu0 %v1559
    %1891 = vmatpush1.bf16.msra.mxu0 %v1558
    %1892 = vmatprep.subr.bf16.mxu0 %v1557
    %1893 = vmatpush1.bf16.msra.mxu0 %v1556
    %1894 = vmatprep.subr.bf16.mxu0 0
    %1895 = vmatpush2.bf16.msra.mxu0 0
    %1896 = vmatprep.subr.bf16.mxu0 0
    %1897 = vmatpush2.bf16.msra.mxu0 0
    %1898 = vmatprep.subr.bf16.mxu0 0
    %1899 = vmatpush2.bf16.msra.mxu0 0
    %1900 = vmatprep.subr.bf16.mxu0 0
    %1901 = vmatpush2.bf16.msra.mxu0 0
    %1902 = vmatprep.subr.bf16.mxu0 0
    %1903 = vmatpush2.bf16.msra.mxu0 0
    %1904 = vmatprep.subr.bf16.mxu0 0
    %1905 = vmatpush2.bf16.msra.mxu0 0
    %1906 = vmatprep.subr.bf16.mxu0 0
    %1907 = vmatpush2.bf16.msra.mxu0 0
    %1908 = vmatprep.subr.bf16.mxu0 0
    %1909 = vmatpush2.bf16.msra.mxu0 0
    %1910 = vmatprep.mubr.bf16.mxu0 0
    %1911 = vmatmul.mubr.bf16.gmra.mxu0 %v1152
    %v1912 = vpop.f32.mrf.mxu0
    %v1913 = vadd.f32 %v1800, %v1912
    %v1914 = vpop.f32.mrf.mxu0
    %v1915 = vadd.f32 %v1802, %v1914
    %v1916 = vpop.f32.mrf.mxu0
    %v1917 = vadd.f32 %v1804, %v1916
    %v1918 = vpop.f32.mrf.mxu0
    %v1919 = vadd.f32 %v1806, %v1918
    %1920 = vmatprep.mubr.bf16.mxu0 0
    %1921 = vmatmul.mubr.bf16.gmra.mxu0 %v1153
    %v1922 = vpop.f32.mrf.mxu0
    %v1923 = vadd.f32 %v1810, %v1922
    %v1924 = vpop.f32.mrf.mxu0
    %v1925 = vadd.f32 %v1812, %v1924
    %v1926 = vpop.f32.mrf.mxu0
    %v1927 = vadd.f32 %v1814, %v1926
    %v1928 = vpop.f32.mrf.mxu0
    %v1929 = vadd.f32 %v1816, %v1928
    %1930 = vmatprep.mubr.bf16.mxu0 0
    %1931 = vmatmul.mubr.bf16.gmra.mxu0 %v1154
    %v1932 = vpop.f32.mrf.mxu0
    %v1933 = vadd.f32 %v1820, %v1932
    %v1934 = vpop.f32.mrf.mxu0
    %v1935 = vadd.f32 %v1822, %v1934
    %v1936 = vpop.f32.mrf.mxu0
    %v1937 = vadd.f32 %v1824, %v1936
    %v1938 = vpop.f32.mrf.mxu0
    %v1939 = vadd.f32 %v1826, %v1938
    %1940 = vmatprep.mubr.bf16.mxu0 0
    %1941 = vmatmul.mubr.bf16.gmra.mxu0 %v1155
    %v1942 = vpop.f32.mrf.mxu0
    %v1943 = vadd.f32 %v1830, %v1942
    %v1944 = vpop.f32.mrf.mxu0
    %v1945 = vadd.f32 %v1832, %v1944
    %v1946 = vpop.f32.mrf.mxu0
    %v1947 = vadd.f32 %v1834, %v1946
    %v1948 = vpop.f32.mrf.mxu0
    %v1949 = vadd.f32 %v1836, %v1948
    %1950 = vmatprep.mubr.bf16.mxu0 0
    %1951 = vmatmul.mubr.bf16.gmra.mxu0 %v1156
    %v1952 = vpop.f32.mrf.mxu0
    %v1953 = vadd.f32 %v1840, %v1952
    %v1954 = vpop.f32.mrf.mxu0
    %v1955 = vadd.f32 %v1842, %v1954
    %v1956 = vpop.f32.mrf.mxu0
    %v1957 = vadd.f32 %v1844, %v1956
    %v1958 = vpop.f32.mrf.mxu0
    %v1959 = vadd.f32 %v1846, %v1958
    %1960 = vmatprep.mubr.bf16.mxu0 0
    %1961 = vmatmul.mubr.bf16.gmra.mxu0 %v1157
    %v1962 = vpop.f32.mrf.mxu0
    %v1963 = vadd.f32 %v1850, %v1962
    %v1964 = vpop.f32.mrf.mxu0
    %v1965 = vadd.f32 %v1852, %v1964
    %v1966 = vpop.f32.mrf.mxu0
    %v1967 = vadd.f32 %v1854, %v1966
    %v1968 = vpop.f32.mrf.mxu0
    %v1969 = vadd.f32 %v1856, %v1968
    %1970 = vmatprep.mubr.bf16.mxu0 0
    %1971 = vmatmul.mubr.bf16.gmra.mxu0 %v1158
    %v1972 = vpop.f32.mrf.mxu0
    %v1973 = vadd.f32 %v1860, %v1972
    %v1974 = vpop.f32.mrf.mxu0
    %v1975 = vadd.f32 %v1862, %v1974
    %v1976 = vpop.f32.mrf.mxu0
    %v1977 = vadd.f32 %v1864, %v1976
    %v1978 = vpop.f32.mrf.mxu0
    %v1979 = vadd.f32 %v1866, %v1978
    %1980 = vmatprep.mubr.bf16.mxu0 0
    %1981 = vmatmul.mubr.bf16.gmra.mxu0 %v1159
    %v1982 = vpop.f32.mrf.mxu0
    %v1983 = vadd.f32 %v1870, %v1982
    %v1984 = vpop.f32.mrf.mxu0
    %v1985 = vadd.f32 %v1872, %v1984
    %v1986 = vpop.f32.mrf.mxu0
    %v1987 = vadd.f32 %v1874, %v1986
    %v1988 = vpop.f32.mrf.mxu0
    %v1989 = vadd.f32 %v1876, %v1988
    %1990 = vdwg.mxu0
    %1991 = vst [vmem:[#allocation5] sm:$0xff] %v1913
    %1992 = vst [vmem:[#allocation5 + $0x8] sm:$0xff] %v1915
    %1993 = vst [vmem:[#allocation5 + $0x10] sm:$0xff] %v1917
    %1994 = vst [vmem:[#allocation5 + $0x18] sm:$0xff] %v1919
    %1995 = vst [vmem:[#allocation5 + $0x20] sm:$0xff] %v1923
    %1996 = vst [vmem:[#allocation5 + $0x28] sm:$0xff] %v1925
    %1997 = vst [vmem:[#allocation5 + $0x30] sm:$0xff] %v1927
    %1998 = vst [vmem:[#allocation5 + $0x38] sm:$0xff] %v1929
    %1999 = vst [vmem:[#allocation5 + $0x40] sm:$0xff] %v1933
    %2000 = vst [vmem:[#allocation5 + $0x48] sm:$0xff] %v1935
    %2001 = vst [vmem:[#allocation5 + $0x50] sm:$0xff] %v1937
    %2002 = vst [vmem:[#allocation5 + $0x58] sm:$0xff] %v1939
    %2003 = vst [vmem:[#allocation5 + $0x60] sm:$0xff] %v1943
    %2004 = vst [vmem:[#allocation5 + $0x68] sm:$0xff] %v1945
    %2005 = vst [vmem:[#allocation5 + $0x70] sm:$0xff] %v1947
    %2006 = vst [vmem:[#allocation5 + $0x78] sm:$0xff] %v1949
    %2007 = vst [vmem:[#allocation5 + $0x80] sm:$0xff] %v1953
    %2008 = vst [vmem:[#allocation5 + $0x88] sm:$0xff] %v1955
    %2009 = vst [vmem:[#allocation5 + $0x90] sm:$0xff] %v1957
    %2010 = vst [vmem:[#allocation5 + $0x98] sm:$0xff] %v1959
    %2011 = vst [vmem:[#allocation5 + $0xa0] sm:$0xff] %v1963
    %2012 = vst [vmem:[#allocation5 + $0xa8] sm:$0xff] %v1965
    %2013 = vst [vmem:[#allocation5 + $0xb0] sm:$0xff] %v1967
    %2014 = vst [vmem:[#allocation5 + $0xb8] sm:$0xff] %v1969
    %2015 = vst [vmem:[#allocation5 + $0xc0] sm:$0xff] %v1973
    %2016 = vst [vmem:[#allocation5 + $0xc8] sm:$0xff] %v1975
    %2017 = vst [vmem:[#allocation5 + $0xd0] sm:$0xff] %v1977
    %2018 = vst [vmem:[#allocation5 + $0xd8] sm:$0xff] %v1979
    %2019 = vst [vmem:[#allocation5 + $0xe0] sm:$0xff] %v1983
    %2020 = vst [vmem:[#allocation5 + $0xe8] sm:$0xff] %v1985
    %2021 = vst [vmem:[#allocation5 + $0xf0] sm:$0xff] %v1987
    %2022 = vst [vmem:[#allocation5 + $0xf8] sm:$0xff] %v1989
    // Predicated region
    $region22: #{tpu_custom_call.1} parent=1 // pred_check
      _
    $region23: #{tpu_custom_call.1} parent=1 // pred_check_branch
      %2024 = sbr.rel (0) target = $region25
    $region24: #{tpu_custom_call.1} parent=1 // pred_region
      %s2026 = ssub.s32 4096, 4096
      %2027 = vsyncadd [#allocation4], %s2026
      %s2028 = sshll.u32 [#allocation5], 4
      %s2029 = int_to_ptr.vmem [resolvable:$true] %s2028
      %2034 = dma.vmem_to_hbm [thread:$0]  %s2029, 4096, %s4, [#allocation4], 256, 256, 16
    $region25: #{tpu_custom_call.1} parent=1 // pred_fallthru
      _
    // Predicated region
    $region26: #{tpu_custom_call.1} parent=1 // pred_check
      _
    $region27: #{tpu_custom_call.1} parent=1 // pred_check_branch
      %2036 = sbr.rel (0) target = $region29
    $region28: #{tpu_custom_call.1} parent=1 // pred_region
      %2037 = dma.done [#allocation4], 4096
    $region29: #{tpu_custom_call.1} parent=1 // pred_fallthru
      _
    %2038 = vsyncpa [#allocation3], 1
    %2039 = vsyncpa [#allocation4], 1

</llo_original>
